<compile_context>
chip_gen: v5e
topology: v5e:2x2
jax: 0.10.0
libtpu: 0.0.40
codegen_flags: <defaults>
</compile_context>

<pallas_src>
import functools
import math

import jax
import jax.numpy as jnp
import numpy as np
from jax import lax
from jax.experimental import pallas as pl
from jax.experimental.pallas import tpu as pltpu


def node_attn_kernel(idx_ref, qkv_ref, wcat_ref, bcat_ref, w2exp_ref, expand_ref,
                     out_ref, m_ref, l_ref, acc_ref, *, n_edges):
    nb = pl.program_id(0)                      # node block ("parallel" axis)
    t = pl.program_id(1)                       # edge tile (reduction axis)
    num_tiles = pl.num_programs(1)

    # NOTE: -1e30 is a load-bearing *finite* sentinel: the one-hot gather
    # `onehot^T @ m_new` relies on 0 * (-1e30) == 0 staying finite, and
    # exp(m_old - m_new) must be exactly 1.0 while both are still the sentinel.
    # Do NOT replace it with -inf.
    neg = jnp.float32(-1e30)

    n_blk, D = out_ref.shape
    H = m_ref.shape[1]
    tile_e = qkv_ref.shape[0]

    @pl.when(t == 0)
    def _():
        m_ref[...] = jnp.full_like(m_ref, neg)
        l_ref[...] = jnp.zeros_like(l_ref)
        acc_ref[...] = jnp.zeros_like(acc_ref)

    qkv = qkv_ref[...]                          # [tE, 3D]
    idx = idx_ref[...]                          # [1, tE] int32

    # Partial last tile: out-of-range rows of qkv / idx are unspecified garbage,
    # so everything derived from them is masked below.
    row = lax.broadcasted_iota(jnp.int32, (tile_e, 1), 0)
    lane = lax.broadcasted_iota(jnp.int32, (1, tile_e), 1)
    valid_row = (t * tile_e + row) < n_edges    # [tE, 1]
    valid_lane = (t * tile_e + lane) < n_edges  # [1, tE]

    # ---- fused w1 | w3 projection: one MXU pass over the edge tile -----------
    # wcat = [ W1^T | [0; W3^T] ] (3D x 2D),  bcat = [b1 | b3] (1 x 2D)
    hv = jnp.dot(qkv, wcat_ref[...], preferred_element_type=jnp.float32) + bcat_ref[...]
    h1 = hv[:, :D]                              # w1([q | k_v | k_e])     [tE, D]
    v = hv[:, D:]                               # w3([k_v | k_e])         [tE, D]
    h1 = jnp.where(h1 >= 0.0, h1, 0.01 * h1)    # leaky_relu (w1 branch only)

    # per-head attention logits via block-diag-expanded w2: [tE, H]
    attn = jnp.dot(h1, w2exp_ref[...], preferred_element_type=jnp.float32)
    attn = jnp.where(valid_row, attn, neg)      # kill garbage lanes of partial tile

    # one-hot membership of each edge in this core's node slice: [n_blk, tE]
    node_iota = lax.broadcasted_iota(jnp.int32, (n_blk, tile_e), 0) + nb * n_blk
    onehot_b = (node_iota == idx) & valid_lane
    onehot_f = onehot_b.astype(jnp.float32)

    # attn^T via identity matmul (MXU) — avoids an XLU transpose of a narrow tile
    eye_h = jnp.eye(H, dtype=jnp.float32)
    attn_t = lax.dot_general(eye_h, attn,
                             dimension_numbers=(((1,), (1,)), ((), ())),
                             preferred_element_type=jnp.float32)        # [H, tE]

    # per-tile segment max for ALL heads in one masked lane reduction.
    # TODO(synk): for very large n_blk*tile_e on v7x (64 MiB VMEM), process heads
    # in pairs here instead of materialising the full [n_blk, H, tE] temporary.
    masked = jnp.where(onehot_b[:, None, :], attn_t[None, :, :], neg)   # [n_blk, H, tE]
    m_tile = jnp.max(masked, axis=-1)                                   # [n_blk, H]

    m_old = m_ref[...]
    m_new = jnp.maximum(m_old, m_tile)
    scale = jnp.exp(m_old - m_new)                                      # [n_blk, H], in [0,1]

    # gather each edge's (new) per-node max back to the tile: [tE, H] = onehot^T @ m_new
    m_edge = lax.dot_general(onehot_f, m_new,
                             dimension_numbers=(((0,), (0,)), ((), ())),
                             preferred_element_type=jnp.float32)
    # min(., 0): in-block edges already satisfy attn <= m_edge; the clamp keeps
    # out-of-block / garbage lanes finite (they are zeroed by the one-hot anyway).
    p = jnp.exp(jnp.minimum(attn - m_edge, 0.0))                        # [tE, H]
    p_full = jnp.dot(p, expand_ref[...], preferred_element_type=jnp.float32)   # [tE, D]

    # fused scatter-add: ONE one-hot matmul with RHS = [p | p*v]  ([tE, H+D])
    rhs = jnp.concatenate([p, p_full * v], axis=1)
    rhs = jnp.where(valid_row, rhs, 0.0)        # garbage rows must not feed NaN*0 to the MXU
    upd = jnp.dot(onehot_f, rhs, preferred_element_type=jnp.float32)    # [n_blk, H+D]
    l_tile = upd[:, :H]
    x_tile = upd[:, H:]

    scale_full = jnp.dot(scale, expand_ref[...], preferred_element_type=jnp.float32)  # [n_blk, D]

    m_ref[...] = m_new
    l_ref[...] = scale * l_ref[...] + l_tile            # denominator kept at head width
    acc_ref[...] = scale_full * acc_ref[...] + x_tile

    @pl.when(t == num_tiles - 1)
    def _():
        denom = jnp.dot(l_ref[...], expand_ref[...], preferred_element_type=jnp.float32)
        # nodes with zero incident edges -> 0 / 1e-16 == 0 (matches segment_sum semantics)
        out_ref[...] = acc_ref[...] / (denom + 1e-16)


def node_attn_pallas(q, k_v, k_e, index, nnode, params, tile_e=512, node_blocks=1):
    E, D = q.shape
    H = params["num_heads"]

    assert nnode % node_blocks == 0
    n_blk = nnode // node_blocks
    assert node_blocks == 1 or n_blk % 8 == 0, "per-core node slice must be sublane aligned"

    # lane-aligned edge tiles; no HBM-side padding (partial last tile masked in-kernel)
    tile_e = max(128, (tile_e // 128) * 128)
    tile_e = min(tile_e, ((E + 127) // 128) * 128)
    num_tiles = -(-E // tile_e)

    qkv = jnp.concatenate([q, k_v, k_e], axis=-1)          # [E, 3D]; w3 input is cols D..3D
    idx = index.astype(jnp.int32).reshape(1, E)

    cost = pl.CostEstimate(
        flops=int(node_blocks * num_tiles
                  * (2 * tile_e * 3 * D * 2 * D            # fused w1|w3 projection
                     + 2 * tile_e * D * H                  # attention logits
                     + 2 * tile_e * H * D                  # head -> feature expand
                     + 2 * n_blk * tile_e * (2 * H + D)    # max gather + fused scatter
                     + 2 * n_blk * H * D)),                # rescale expand
        transcendentals=int(node_blocks * num_tiles * (tile_e + n_blk) * H),
        bytes_accessed=int(4 * (node_blocks * E * (3 * D + 1) + nnode * D
                                + 6 * D * D + 2 * D + 2 * H * D)),
    )

    kernel = functools.partial(node_attn_kernel, n_edges=E)

    return pl.pallas_call(
        kernel,
        out_shape=jax.ShapeDtypeStruct((nnode, D), jnp.float32),
        grid_spec=pltpu.PrefetchScalarGridSpec(
            num_scalar_prefetch=0,
            grid=(node_blocks, num_tiles),
            in_specs=[
                pl.BlockSpec((1, tile_e), lambda nb, t: (0, t)),       # index row
                pl.BlockSpec((tile_e, 3 * D), lambda nb, t: (t, 0)),   # [q | k_v | k_e]
                # TODO(synk): pipeline_mode=pl.Buffered(1) on the constant operands below
                # would halve their double-buffered VMEM (only matters for D >= 256).
                pl.BlockSpec((3 * D, 2 * D), lambda nb, t: (0, 0)),    # [W1^T | 0;W3^T]
                pl.BlockSpec((1, 2 * D), lambda nb, t: (0, 0)),        # [b1 | b3]
                pl.BlockSpec((D, H), lambda nb, t: (0, 0)),            # block-diag w2
                pl.BlockSpec((H, D), lambda nb, t: (0, 0)),            # head->feat expand
            ],
            out_specs=pl.BlockSpec((n_blk, D), lambda nb, t: (nb, 0)),
            scratch_shapes=[
                pltpu.VMEM((n_blk, H), jnp.float32),   # running segment max
                pltpu.VMEM((n_blk, H), jnp.float32),   # running softmax denominator (head width)
                pltpu.VMEM((n_blk, D), jnp.float32),   # running weighted-value sum
            ],
        ),
        compiler_params=pltpu.CompilerParams(
            dimension_semantics=("parallel", "arbitrary"),  # nodes parallel, edges reduce
            vmem_limit_bytes=48 * 1024 * 1024,              # inside v7x's 64 MiB VMEM
        ),
        cost_estimate=cost,
    )(idx, qkv, params["wcat"], params["bcat"], params["w2exp"], params["expand"])


def init_params(key, embed_dim, num_heads):
    hd = embed_dim // num_heads
    k1, k2, k3, k4, k5 = jax.random.split(key, 5)
    gain = 1.0 / math.sqrt(2.0)

    def xavier(k, shape):  # shape = (fan_out, fan_in), matches nn.init.xavier_uniform_
        fan_out, fan_in = shape
        bound = gain * math.sqrt(6.0 / (fan_in + fan_out))
        return jax.random.uniform(k, shape, jnp.float32, -bound, bound)

    D = embed_dim
    W1 = xavier(k1, (D, 3 * D))
    W2 = xavier(k2, (num_heads, hd))
    W3 = xavier(k3, (D, 2 * D))
    b1 = jax.random.uniform(k4, (1, D), jnp.float32,
                            -1.0 / math.sqrt(3 * D), 1.0 / math.sqrt(3 * D))
    b3 = jax.random.uniform(k5, (1, D), jnp.float32,
                            -1.0 / math.sqrt(2 * D), 1.0 / math.sqrt(2 * D))

    eyeH = jnp.eye(num_heads, dtype=jnp.float32)
    # block-diag expansion of w2 -> [D, H] so einsum('nhc,hc->nh') becomes h1 @ w2exp
    w2exp = (W2[:, :, None] * eyeH[:, None, :]).reshape(D, num_heads)
    # head -> feature expansion matrix [H, D] (repeat each head weight head_dim times)
    expand = jnp.kron(eyeH, jnp.ones((1, hd), jnp.float32))
    # fused projection: qkv @ wcat -> [w1(q|kv|ke) | w3(kv|ke)]
    wcat = jnp.concatenate(
        [W1.T, jnp.concatenate([jnp.zeros((D, D), jnp.float32), W3.T], axis=0)], axis=1)
    bcat = jnp.concatenate([b1, b3], axis=-1)

    return dict(num_heads=num_heads, head_dim=hd,
                W1=W1, W2=W2, W3=W3, b1=b1, b3=b3,
                wcat=wcat, bcat=bcat, w2exp=w2exp, expand=expand)


def node_attn_ref(q, k_v, k_e, index, nnode, params):
    """Pure-JAX reference mirroring the PyTorch forward."""
    H, hd = params["num_heads"], params["head_dim"]
    D = H * hd
    x = jnp.concatenate([q, k_v, k_e], axis=-1) @ params["W1"].T + params["b1"]
    x = x.reshape(-1, H, hd)
    x = jnp.where(x >= 0, x, 0.01 * x)
    attn = jnp.einsum('nhc,hc->nh', x, params["W2"])[:, :, None]
    gmax = jax.ops.segment_max(attn, index, num_segments=nnode)
    p = jnp.exp(attn - gmax[index])
    gsum = jax.ops.segment_sum(p, index, num_segments=nnode)[index] + 1e-16
    aw = p / gsum
    v = jnp.concatenate([k_v, k_e], axis=-1) @ params["W3"].T + params["b3"]
    v = v.reshape(-1, H, hd)
    xe = (aw * v).reshape(-1, D)
    return jax.ops.segment_sum(xe, index, num_segments=nnode)


if __name__ == "__main__":
    embed_dim, num_heads = 32, 4
    n_edges, n_nodes = 200, 16   # 2 edge tiles of 128: exercises online rescale + partial tile mask

    key = jax.random.PRNGKey(0)
    kp, kq, kkv, kke, ki = jax.random.split(key, 5)
    params = init_params(kp, embed_dim, num_heads)

    q = jax.random.normal(kq, (n_edges, embed_dim), jnp.float32)
    k_v = jax.random.normal(kkv, (n_edges, embed_dim), jnp.float32)
    k_e = jax.random.normal(kke, (n_edges, embed_dim), jnp.float32)
    index = jax.random.randint(ki, (n_edges,), 0, n_nodes, dtype=jnp.int32)

    ref = node_attn_ref(q, k_v, k_e, index, n_nodes, params)

    # single-core path (node_blocks=1) and the v7x two-TensorCore path (node_blocks=2);
    # both are correct on any generation (node_blocks=2 is just sequential on 1-TC chips).
    for nb_blocks in (1, 2):
        out = node_attn_pallas(q, k_v, k_e, index, n_nodes, params,
                               tile_e=128, node_blocks=nb_blocks)
        out = jax.block_until_ready(out)
        assert out.shape == (n_nodes, embed_dim)
        np.testing.assert_allclose(np.asarray(out), np.asarray(ref), rtol=5e-5, atol=5e-5)

    print("KERNEL_OK")
</pallas_src>

<mosaic_0001>
module attributes {stable_mosaic.version = 11 : i64} {
  func.func @node_attn_kernel(%arg0: i32, %arg1: i32, %arg2: memref<1x128xi32, #tpu.memory_space<vmem>>, %arg3: memref<128x96xf32, #tpu.memory_space<vmem>>, %arg4: memref<96x64xf32, #tpu.memory_space<vmem>>, %arg5: memref<1x64xf32, #tpu.memory_space<vmem>>, %arg6: memref<32x4xf32, #tpu.memory_space<vmem>>, %arg7: memref<4x32xf32, #tpu.memory_space<vmem>>, %arg8: memref<16x32xf32, #tpu.memory_space<vmem>>, %arg9: memref<16x4xf32, #tpu.memory_space<vmem>>, %arg10: memref<16x4xf32, #tpu.memory_space<vmem>>, %arg11: memref<16x32xf32, #tpu.memory_space<vmem>>) attributes {dimension_semantics = [#tpu.dimension_semantics<parallel>, #tpu.dimension_semantics<arbitrary>], iteration_bounds = array<i64: 1, 2>, scalar_prefetch = 0 : i64, scratch_operands = 3 : i64, tpu.core_type = #tpu.core_type<tc>, window_params = [{transform_indices = @transform_0, window_bounds = array<i64: 1, 128>}, {transform_indices = @transform_1, window_bounds = array<i64: 128, 96>}, {pipeline_mode = #tpu.pipeline_mode<synchronous>, transform_indices = @transform_2, window_bounds = array<i64: 96, 64>}, {pipeline_mode = #tpu.pipeline_mode<synchronous>, transform_indices = @transform_3, window_bounds = array<i64: 1, 64>}, {pipeline_mode = #tpu.pipeline_mode<synchronous>, transform_indices = @transform_4, window_bounds = array<i64: 32, 4>}, {pipeline_mode = #tpu.pipeline_mode<synchronous>, transform_indices = @transform_5, window_bounds = array<i64: 4, 32>}, {transform_indices = @transform_6, window_bounds = array<i64: 16, 32>}]} {
    %c0_i32 = arith.constant 0 : i32
    %0 = arith.cmpi eq, %arg1, %c0_i32 : i32
    %1 = arith.extui %0 : i1 to i32
    %cst = arith.constant -1.000000e+30 : f32
    %c0_i32_0 = arith.constant 0 : i32
    %2 = arith.cmpi ne, %1, %c0_i32_0 : i32
    scf.if %2 {
      %96 = vector.broadcast %cst : f32 to vector<16x4xf32>
      %c0_44 = arith.constant 0 : index
      %c0_45 = arith.constant 0 : index
      %97 = vector.load %arg9[%c0_44, %c0_45] : memref<16x4xf32, #tpu.memory_space<vmem>>, vector<16x4xf32>
      tpu.vector_store %arg9[%c0_44, %c0_45], %96 {strides = array<i32>} : memref<16x4xf32, #tpu.memory_space<vmem>>, vector<16x4xf32>,
      %cst_46 = arith.constant 0.000000e+00 : f32
      %98 = vector.broadcast %cst_46 : f32 to vector<16x4xf32>
      %c0_47 = arith.constant 0 : index
      %c0_48 = arith.constant 0 : index
      %99 = vector.load %arg10[%c0_47, %c0_48] : memref<16x4xf32, #tpu.memory_space<vmem>>, vector<16x4xf32>
      tpu.vector_store %arg10[%c0_47, %c0_48], %98 {strides = array<i32>} : memref<16x4xf32, #tpu.memory_space<vmem>>, vector<16x4xf32>,
      %cst_49 = arith.constant 0.000000e+00 : f32
      %100 = vector.broadcast %cst_49 : f32 to vector<16x32xf32>
      %c0_50 = arith.constant 0 : index
      %c0_51 = arith.constant 0 : index
      %101 = vector.load %arg11[%c0_50, %c0_51] : memref<16x32xf32, #tpu.memory_space<vmem>>, vector<16x32xf32>
      tpu.vector_store %arg11[%c0_50, %c0_51], %100 {strides = array<i32>} : memref<16x32xf32, #tpu.memory_space<vmem>>, vector<16x32xf32>,
    } else {
    }
    %c0 = arith.constant 0 : index
    %c0_1 = arith.constant 0 : index
    %3 = vector.load %arg3[%c0, %c0_1] : memref<128x96xf32, #tpu.memory_space<vmem>>, vector<128x96xf32>
    %c0_2 = arith.constant 0 : index
    %c0_3 = arith.constant 0 : index
    %4 = vector.load %arg2[%c0_2, %c0_3] : memref<1x128xi32, #tpu.memory_space<vmem>>, vector<1x128xi32>
    %5 = tpu.iota {dimensions = array<i32: 0>} : vector<128x1xi32>
    %6 = tpu.iota {dimensions = array<i32: 1>} : vector<1x128xi32>
    %c128_i32 = arith.constant 128 : i32
    %7 = arith.muli %arg1, %c128_i32 : i32
    %8 = vector.broadcast %7 : i32 to vector<128x1xi32>
    %9 = arith.addi %8, %5 : vector<128x1xi32>
    %c200_i32 = arith.constant 200 : i32
    %10 = vector.broadcast %c200_i32 : i32 to vector<128x1xi32>
    %11 = arith.cmpi slt, %9, %10 : vector<128x1xi32>
    %c128_i32_4 = arith.constant 128 : i32
    %12 = arith.muli %arg1, %c128_i32_4 : i32
    %13 = vector.broadcast %12 : i32 to vector<1x128xi32>
    %14 = arith.addi %13, %6 : vector<1x128xi32>
    %c200_i32_5 = arith.constant 200 : i32
    %15 = vector.broadcast %c200_i32_5 : i32 to vector<1x128xi32>
    %16 = arith.cmpi slt, %14, %15 : vector<1x128xi32>
    %c0_6 = arith.constant 0 : index
    %c0_7 = arith.constant 0 : index
    %17 = vector.load %arg4[%c0_6, %c0_7] : memref<96x64xf32, #tpu.memory_space<vmem>>, vector<96x64xf32>
    %cst_8 = arith.constant dense<0.000000e+00> : vector<128x64xf32>
    %18 = tpu.matmul %3, %17, %cst_8 {dimension_numbers = #tpu.dot_dimension_numbers<[1], [0], [0], [1], [0, 0, 1, 1], [], []>} : vector<128x96xf32>, vector<96x64xf32>, vector<128x64xf32> -> vector<128x64xf32>
    %c0_9 = arith.constant 0 : index
    %c0_10 = arith.constant 0 : index
    %19 = vector.load %arg5[%c0_9, %c0_10] : memref<1x64xf32, #tpu.memory_space<vmem>>, vector<1x64xf32>
    %20 = vector.broadcast %19 : vector<1x64xf32> to vector<128x64xf32>
    %21 = arith.addf %18, %20 : vector<128x64xf32>
    %22 = vector.extract_strided_slice %21 {offsets = [0, 0], sizes = [128, 32], strides = [1, 1]} : vector<128x64xf32> to vector<128x32xf32>
    %23 = vector.extract_strided_slice %21 {offsets = [0, 32], sizes = [128, 32], strides = [1, 1]} : vector<128x64xf32> to vector<128x32xf32>
    %cst_11 = arith.constant 0.000000e+00 : f32
    %24 = vector.broadcast %cst_11 : f32 to vector<128x32xf32>
    %25 = arith.cmpf oge, %22, %24 : vector<128x32xf32>
    %cst_12 = arith.constant 0.00999999977 : f32
    %26 = vector.broadcast %cst_12 : f32 to vector<128x32xf32>
    %27 = arith.mulf %26, %22 : vector<128x32xf32>
    %28 = arith.select %25, %22, %27 : vector<128x32xi1>, vector<128x32xf32>
    %c0_13 = arith.constant 0 : index
    %c0_14 = arith.constant 0 : index
    %29 = vector.load %arg6[%c0_13, %c0_14] : memref<32x4xf32, #tpu.memory_space<vmem>>, vector<32x4xf32>
    %cst_15 = arith.constant dense<0.000000e+00> : vector<128x4xf32>
    %30 = tpu.matmul %28, %29, %cst_15 {dimension_numbers = #tpu.dot_dimension_numbers<[1], [0], [0], [1], [0, 0, 1, 1], [], []>} : vector<128x32xf32>, vector<32x4xf32>, vector<128x4xf32> -> vector<128x4xf32>
    %cst_16 = arith.constant -1.000000e+30 : f32
    %31 = vector.shape_cast %11 : vector<128x1xi1> to vector<128x1xi1>
    %32 = vector.broadcast %31 : vector<128x1xi1> to vector<128x4xi1>
    %33 = vector.broadcast %cst_16 : f32 to vector<128x4xf32>
    %34 = arith.select %32, %30, %33 : vector<128x4xi1>, vector<128x4xf32>
    %35 = tpu.iota {dimensions = array<i32: 0>} : vector<16x128xi32>
    %c16_i32 = arith.constant 16 : i32
    %36 = arith.muli %arg0, %c16_i32 : i32
    %37 = vector.broadcast %36 : i32 to vector<16x128xi32>
    %38 = arith.addi %35, %37 : vector<16x128xi32>
    %39 = vector.broadcast %4 : vector<1x128xi32> to vector<16x128xi32>
    %40 = arith.cmpi eq, %38, %39 : vector<16x128xi32>
    %41 = vector.broadcast %16 : vector<1x128xi1> to vector<16x128xi1>
    %42 = arith.andi %40, %41 : vector<16x128xi1>
    %43 = arith.extui %42 : vector<16x128xi1> to vector<16x128xi32>
    %44 = arith.sitofp %43 : vector<16x128xi32> to vector<16x128xf32>
    %45 = tpu.iota {dimensions = array<i32: 0>} : vector<4x4xi32>
    %46 = tpu.iota {dimensions = array<i32: 1>} : vector<4x4xi32>
    %c0_i32_17 = arith.constant 0 : i32
    %47 = vector.broadcast %c0_i32_17 : i32 to vector<4x4xi32>
    %48 = arith.addi %45, %47 : vector<4x4xi32>
    %49 = arith.cmpi eq, %48, %46 : vector<4x4xi32>
    %50 = arith.extui %49 : vector<4x4xi1> to vector<4x4xi32>
    %51 = arith.sitofp %50 : vector<4x4xi32> to vector<4x4xf32>
    %cst_18 = arith.constant dense<0.000000e+00> : vector<4x128xf32>
    %52 = tpu.matmul %51, %34, %cst_18 {dimension_numbers = #tpu.dot_dimension_numbers<[1], [1], [0], [0], [0, 0, 1, 0], [], []>} : vector<4x4xf32>, vector<128x4xf32>, vector<4x128xf32> -> vector<4x128xf32>
    %53 = vector.shape_cast %42 : vector<16x128xi1> to vector<16x1x128xi1>
    %54 = vector.shape_cast %52 : vector<4x128xf32> to vector<1x4x128xf32>
    %cst_19 = arith.constant -1.000000e+30 : f32
    %55 = vector.shape_cast %53 : vector<16x1x128xi1> to vector<16x1x128xi1>
    %56 = vector.broadcast %55 : vector<16x1x128xi1> to vector<16x4x128xi1>
    %57 = vector.shape_cast %54 : vector<1x4x128xf32> to vector<1x4x128xf32>
    %58 = vector.broadcast %57 : vector<1x4x128xf32> to vector<16x4x128xf32>
    %59 = vector.broadcast %cst_19 : f32 to vector<16x4x128xf32>
    %60 = arith.select %56, %58, %59 : vector<16x4x128xi1>, vector<16x4x128xf32>
    %cst_20 = arith.constant dense<0xFF800000> : vector<16x4xf32>
    %61 = vector.multi_reduction <maximumf>, %60, %cst_20 [2] : vector<16x4x128xf32> to vector<16x4xf32>
    %c0_21 = arith.constant 0 : index
    %c0_22 = arith.constant 0 : index
    %62 = vector.load %arg9[%c0_21, %c0_22] : memref<16x4xf32, #tpu.memory_space<vmem>>, vector<16x4xf32>
    %63 = arith.maximumf %62, %61 : vector<16x4xf32>
    %64 = arith.subf %62, %63 : vector<16x4xf32>
    %65 = math.exp %64 : vector<16x4xf32>
    %cst_23 = arith.constant dense<0.000000e+00> : vector<128x4xf32>
    %66 = tpu.matmul %44, %63, %cst_23 {dimension_numbers = #tpu.dot_dimension_numbers<[0], [0], [1], [1], [0, 1, 1, 1], [], []>} : vector<16x128xf32>, vector<16x4xf32>, vector<128x4xf32> -> vector<128x4xf32>
    %67 = arith.subf %34, %66 : vector<128x4xf32>
    %cst_24 = arith.constant 0.000000e+00 : f32
    %68 = vector.broadcast %cst_24 : f32 to vector<128x4xf32>
    %69 = arith.minimumf %67, %68 : vector<128x4xf32>
    %70 = math.exp %69 : vector<128x4xf32>
    %c0_25 = arith.constant 0 : index
    %c0_26 = arith.constant 0 : index
    %71 = vector.load %arg7[%c0_25, %c0_26] : memref<4x32xf32, #tpu.memory_space<vmem>>, vector<4x32xf32>
    %cst_27 = arith.constant dense<0.000000e+00> : vector<128x32xf32>
    %72 = tpu.matmul %70, %71, %cst_27 {dimension_numbers = #tpu.dot_dimension_numbers<[1], [0], [0], [1], [0, 0, 1, 1], [], []>} : vector<128x4xf32>, vector<4x32xf32>, vector<128x32xf32> -> vector<128x32xf32>
    %73 = arith.mulf %72, %23 : vector<128x32xf32>
    %74 = tpu.concatenate %70, %73 in 1 : vector<128x4xf32>, vector<128x32xf32> -> vector<128x36xf32>
    %cst_28 = arith.constant 0.000000e+00 : f32
    %75 = vector.shape_cast %11 : vector<128x1xi1> to vector<128x1xi1>
    %76 = vector.broadcast %75 : vector<128x1xi1> to vector<128x36xi1>
    %77 = vector.broadcast %cst_28 : f32 to vector<128x36xf32>
    %78 = arith.select %76, %74, %77 : vector<128x36xi1>, vector<128x36xf32>
    %cst_29 = arith.constant dense<0.000000e+00> : vector<16x36xf32>
    %79 = tpu.matmul %44, %78, %cst_29 {dimension_numbers = #tpu.dot_dimension_numbers<[1], [0], [0], [1], [0, 0, 1, 1], [], []>} : vector<16x128xf32>, vector<128x36xf32>, vector<16x36xf32> -> vector<16x36xf32>
    %80 = vector.extract_strided_slice %79 {offsets = [0, 0], sizes = [16, 4], strides = [1, 1]} : vector<16x36xf32> to vector<16x4xf32>
    %81 = vector.extract_strided_slice %79 {offsets = [0, 4], sizes = [16, 32], strides = [1, 1]} : vector<16x36xf32> to vector<16x32xf32>
    %c0_30 = arith.constant 0 : index
    %c0_31 = arith.constant 0 : index
    %82 = vector.load %arg7[%c0_30, %c0_31] : memref<4x32xf32, #tpu.memory_space<vmem>>, vector<4x32xf32>
    %cst_32 = arith.constant dense<0.000000e+00> : vector<16x32xf32>
    %83 = tpu.matmul %65, %82, %cst_32 {dimension_numbers = #tpu.dot_dimension_numbers<[1], [0], [0], [1], [0, 0, 1, 1], [], []>} : vector<16x4xf32>, vector<4x32xf32>, vector<16x32xf32> -> vector<16x32xf32>
    %c0_33 = arith.constant 0 : index
    %c0_34 = arith.constant 0 : index
    %84 = vector.load %arg9[%c0_33, %c0_34] : memref<16x4xf32, #tpu.memory_space<vmem>>, vector<16x4xf32>
    tpu.vector_store %arg9[%c0_33, %c0_34], %63 {strides = array<i32>} : memref<16x4xf32, #tpu.memory_space<vmem>>, vector<16x4xf32>,
    %c0_35 = arith.constant 0 : index
    %c0_36 = arith.constant 0 : index
    %85 = vector.load %arg10[%c0_35, %c0_36] : memref<16x4xf32, #tpu.memory_space<vmem>>, vector<16x4xf32>
    %86 = arith.mulf %65, %85 : vector<16x4xf32>
    %87 = arith.addf %86, %80 : vector<16x4xf32>
    %c0_37 = arith.constant 0 : index
    %c0_38 = arith.constant 0 : index
    %88 = vector.load %arg10[%c0_37, %c0_38] : memref<16x4xf32, #tpu.memory_space<vmem>>, vector<16x4xf32>
    tpu.vector_store %arg10[%c0_37, %c0_38], %87 {strides = array<i32>} : memref<16x4xf32, #tpu.memory_space<vmem>>, vector<16x4xf32>,
    %c0_39 = arith.constant 0 : index
    %c0_40 = arith.constant 0 : index
    %89 = vector.load %arg11[%c0_39, %c0_40] : memref<16x32xf32, #tpu.memory_space<vmem>>, vector<16x32xf32>
    %90 = arith.mulf %83, %89 : vector<16x32xf32>
    %91 = arith.addf %90, %81 : vector<16x32xf32>
    %c0_41 = arith.constant 0 : index
    %c0_42 = arith.constant 0 : index
    %92 = vector.load %arg11[%c0_41, %c0_42] : memref<16x32xf32, #tpu.memory_space<vmem>>, vector<16x32xf32>
    tpu.vector_store %arg11[%c0_41, %c0_42], %91 {strides = array<i32>} : memref<16x32xf32, #tpu.memory_space<vmem>>, vector<16x32xf32>,
    %c1_i32 = arith.constant 1 : i32
    %93 = arith.cmpi eq, %arg1, %c1_i32 : i32
    %94 = arith.extui %93 : i1 to i32
    %c0_i32_43 = arith.constant 0 : i32
    %95 = arith.cmpi ne, %94, %c0_i32_43 : i32
    scf.if %95 {
      %c0_44 = arith.constant 0 : index
      %c0_45 = arith.constant 0 : index
      %96 = vector.load %arg10[%c0_44, %c0_45] : memref<16x4xf32, #tpu.memory_space<vmem>>, vector<16x4xf32>
      %c0_46 = arith.constant 0 : index
      %c0_47 = arith.constant 0 : index
      %97 = vector.load %arg7[%c0_46, %c0_47] : memref<4x32xf32, #tpu.memory_space<vmem>>, vector<4x32xf32>
      %cst_48 = arith.constant dense<0.000000e+00> : vector<16x32xf32>
      %98 = tpu.matmul %96, %97, %cst_48 {dimension_numbers = #tpu.dot_dimension_numbers<[1], [0], [0], [1], [0, 0, 1, 1], [], []>} : vector<16x4xf32>, vector<4x32xf32>, vector<16x32xf32> -> vector<16x32xf32>
      %c0_49 = arith.constant 0 : index
      %c0_50 = arith.constant 0 : index
      %99 = vector.load %arg11[%c0_49, %c0_50] : memref<16x32xf32, #tpu.memory_space<vmem>>, vector<16x32xf32>
      %cst_51 = arith.constant 1.000000e-16 : f32
      %100 = vector.broadcast %cst_51 : f32 to vector<16x32xf32>
      %101 = arith.addf %98, %100 : vector<16x32xf32>
      %102 = arith.divf %99, %101 : vector<16x32xf32>
      %c0_52 = arith.constant 0 : index
      %c0_53 = arith.constant 0 : index
      %103 = vector.load %arg8[%c0_52, %c0_53] : memref<16x32xf32, #tpu.memory_space<vmem>>, vector<16x32xf32>
      tpu.vector_store %arg8[%c0_52, %c0_53], %102 {strides = array<i32>} : memref<16x32xf32, #tpu.memory_space<vmem>>, vector<16x32xf32>,
    } else {
    }
    return
  }
  func.func @transform_0(%arg0: i32, %arg1: i32) -> (i32, i32) {
    %c0_i32 = arith.constant 0 : i32
    %c0_i32_0 = arith.constant 0 : i32
    return %c0_i32, %arg1 : i32, i32
  }
  func.func @transform_1(%arg0: i32, %arg1: i32) -> (i32, i32) {
    %c0_i32 = arith.constant 0 : i32
    %c0_i32_0 = arith.constant 0 : i32
    return %arg1, %c0_i32 : i32, i32
  }
  func.func @transform_2(%arg0: i32, %arg1: i32) -> (i32, i32) {
    %c0_i32 = arith.constant 0 : i32
    %c0_i32_0 = arith.constant 0 : i32
    %c0_i32_1 = arith.constant 0 : i32
    return %c0_i32, %c0_i32_0 : i32, i32
  }
  func.func @transform_3(%arg0: i32, %arg1: i32) -> (i32, i32) {
    %c0_i32 = arith.constant 0 : i32
    %c0_i32_0 = arith.constant 0 : i32
    %c0_i32_1 = arith.constant 0 : i32
    return %c0_i32, %c0_i32_0 : i32, i32
  }
  func.func @transform_4(%arg0: i32, %arg1: i32) -> (i32, i32) {
    %c0_i32 = arith.constant 0 : i32
    %c0_i32_0 = arith.constant 0 : i32
    %c0_i32_1 = arith.constant 0 : i32
    return %c0_i32, %c0_i32_0 : i32, i32
  }
  func.func @transform_5(%arg0: i32, %arg1: i32) -> (i32, i32) {
    %c0_i32 = arith.constant 0 : i32
    %c0_i32_0 = arith.constant 0 : i32
    %c0_i32_1 = arith.constant 0 : i32
    return %c0_i32, %c0_i32_0 : i32, i32
  }
  func.func @transform_6(%arg0: i32, %arg1: i32) -> (i32, i32) {
    %c0_i32 = arith.constant 0 : i32
    %c0_i32_0 = arith.constant 0 : i32
    return %arg0, %c0_i32 : i32, i32
  }
}

</mosaic_0001>

<llo_original>
// kernel: tpu_custom_call.1
$region0: #{tpu_custom_call.1}
  #allocation0 [shape = 'u32[]', space=smem, size = 0x4, offset = 0x4, fixed_abs, tag = 'smem constant byte address 0x4 - core index']
  #allocation1 [shape = 'u32[72,128]{1,0:T(1,128)}', space=vmem, size = 0x9000, scoped, tag = 'internal scratch']
  #allocation2 [shape = 'f32[16,4]{1,0:T(8,128)}', space=vmem, size = 0x2000, scoped, tag = 'scratch operand']
  #allocation3 [shape = 'f32[16,4]{1,0:T(8,128)}', space=vmem, size = 0x2000, scoped, tag = 'scratch operand']
  #allocation4 [shape = 'f32[16,32]{1,0:T(8,128)}', space=vmem, size = 0x2000, scoped, tag = 'scratch operand']
  %s0 = inlined_call_operand.vmem [shape: s32[1,200], index: 0, kind: input, shape index: {}]
  %s1 = inlined_call_operand.vmem [shape: f32[200,96], index: 1, kind: input, shape index: {}]
  %s2 = inlined_call_operand.vmem [shape: f32[96,64], index: 2, kind: input, shape index: {}]
  %s3 = inlined_call_operand.vmem [shape: f32[1,64], index: 3, kind: input, shape index: {}]
  %s4 = inlined_call_operand.vmem [shape: f32[32,4], index: 4, kind: input, shape index: {}]
  %s5 = inlined_call_operand.vmem [shape: f32[4,32], index: 5, kind: input, shape index: {}]
  %s6 = inlined_call_operand.hbm [shape: f32[16,32], index: 6, kind: output, shape index: {}]
  %s7 = sld [smem:[#allocation0]]
  $region65: #{tpu_custom_call.1} parent=0
    _
  %s9 = ssub.s32 1, %s7
  %s10 = scalar_select 0, %s9, %s7
  $region1: #{tpu_custom_call.1} parent=0
    #allocation5 [shape = 'u8[8192]{0}', space=vmem, size = 0x2000, scoped, tag = 'output window, operand 0, single buffered']
    #allocation6 [shape = 's32[2]{0}', space=sflag, size = 0x8, scoped, tag = 'scoped memory for tpu_custom_call.1']
    %11 = vsyncpa [#allocation6], 0
    loop: start=0, step=1, limit=4
    $region2: #{tpu_custom_call.1} parent=1 // loop_pre_header
      _
    $region3: #{tpu_custom_call.1} parent=1 // loop_header
      %s13 = sphi 0, %s17
      %p14 = scmp.ge.s32.totalorder %s13, 4
      %s20 = sphi 0, %s32
      %s21 = sphi 0, %s28
      %s22 = sphi 0, %s20
      %s23 = sphi 0, %s21
      %s24 = sphi 0, %s22
      %s25 = sphi 0, %s23
      %s35 = sphi 0, %s37
      %s38 = sphi 0, %s35
      %s39 = sphi 0, %s38
      %s55 = sphi 0, %s39
      %s61 = sphi 0, %s63
      %s64 = sphi 0, %s61
      %s65 = sphi 0, %s64
      %s81 = sphi 0, %s65
      %s85 = sphi 0, %s85
      %s87 = sphi 0, %s85
      %s88 = sphi 0, %s87
      %s102 = sphi 0, %s88
      %s106 = sphi 0, %s106
      %s108 = sphi 0, %s106
      %s109 = sphi 0, %s108
      %s123 = sphi 0, %s109
      %s127 = sphi 0, %s127
      %s129 = sphi 0, %s127
      %s130 = sphi 0, %s129
      %s144 = sphi 0, %s130
      %s148 = sphi 0, %s148
      %s150 = sphi 0, %s148
      %s151 = sphi 0, %s150
      %s165 = sphi 0, %s151
      %s171 = sphi 0, %s173
      %s174 = sphi 0, %s171
      %s175 = sphi 0, %s174
      %s191 = sphi 0, %s175
    $region4: #{tpu_custom_call.1} parent=1 // loop_header_branch
      %16 = sbr.rel (%p14) target = $region8
    $region5: #{tpu_custom_call.1} parent=1 // loop_body
      %s18 = ssub.s32 %s13, 1
      %s19 = ssub.s32 %s13, 2
      %s26 = sadd.s32 1, %s21
      %p27 = scmp.ge.s32.totalorder %s26, 2
      %s28 = scalar_select %p27, 0, %s26
      %s29 = sadd.s32 1, %s20
      %s30 = scalar_select %p27, %s29, %s20
      %p31 = scmp.ge.s32.totalorder %s30, 1
      %s32 = scalar_select %p31, 0, %s30
      %s33 = ssub.s32 %s21, %s28
      %p34 = scmp.eq.s32.totalorder %s33, 0
      %s36 = sadd.s32 %s35, 1
      %s37 = scalar_select %p34, %s35, %s36
      %p40 = pneg %p34
      %p41 = scmp.eq.s32.totalorder %s13, 1
      %p42 = por %p40, %p41
      %p43 = scmp.ne.s32.totalorder %s35, %s38
      %p44 = scmp.eq.s32.totalorder %s13, 0
      %p45 = por %p43, %p44
      %p46 = scmp.ne.s32.totalorder %s35, %s38
      %p47 = scmp.eq.s32.totalorder %s18, 1
      %p48 = por %p46, %p47
      %p49 = scmp.ne.s32.totalorder %s38, %s39
      %p50 = scmp.eq.s32.totalorder %s18, 0
      %p51 = por %p49, %p50
      %p52 = scmp.ne.s32.totalorder %s38, %s39
      %p53 = scmp.eq.s32.totalorder %s19, 1
      %p54 = por %p52, %p53
      %p56 = scmp.ne.s32.totalorder %s39, %s55
      %p57 = scmp.eq.s32.totalorder %s19, 0
      %p58 = por %p56, %p57
      %s59 = ssub.s32 %s21, %s28
      %p60 = scmp.eq.s32.totalorder %s59, 0
      %s62 = sadd.s32 %s61, 1
      %s63 = scalar_select %p60, %s61, %s62
      %p66 = pneg %p60
      %p67 = scmp.eq.s32.totalorder %s13, 1
      %p68 = por %p66, %p67
      %p69 = scmp.ne.s32.totalorder %s61, %s64
      %p70 = scmp.eq.s32.totalorder %s13, 0
      %p71 = por %p69, %p70
      %p72 = scmp.ne.s32.totalorder %s61, %s64
      %p73 = scmp.eq.s32.totalorder %s18, 1
      %p74 = por %p72, %p73
      %p75 = scmp.ne.s32.totalorder %s64, %s65
      %p76 = scmp.eq.s32.totalorder %s18, 0
      %p77 = por %p75, %p76
      %p78 = scmp.ne.s32.totalorder %s64, %s65
      %p79 = scmp.eq.s32.totalorder %s19, 1
      %p80 = por %p78, %p79
      %p82 = scmp.ne.s32.totalorder %s65, %s81
      %p83 = scmp.eq.s32.totalorder %s19, 0
      %p84 = por %p82, %p83
      %s86 = sadd.s32 %s85, 1
      %p89 = scmp.eq.s32.totalorder %s13, 1
      %p90 = scmp.ne.s32.totalorder %s85, %s87
      %p91 = scmp.eq.s32.totalorder %s13, 0
      %p92 = por %p90, %p91
      %p93 = scmp.ne.s32.totalorder %s85, %s87
      %p94 = scmp.eq.s32.totalorder %s18, 1
      %p95 = por %p93, %p94
      %p96 = scmp.ne.s32.totalorder %s87, %s88
      %p97 = scmp.eq.s32.totalorder %s18, 0
      %p98 = por %p96, %p97
      %p99 = scmp.ne.s32.totalorder %s87, %s88
      %p100 = scmp.eq.s32.totalorder %s19, 1
      %p101 = por %p99, %p100
      %p103 = scmp.ne.s32.totalorder %s88, %s102
      %p104 = scmp.eq.s32.totalorder %s19, 0
      %p105 = por %p103, %p104
      %s107 = sadd.s32 %s106, 1
      %p110 = scmp.eq.s32.totalorder %s13, 1
      %p111 = scmp.ne.s32.totalorder %s106, %s108
      %p112 = scmp.eq.s32.totalorder %s13, 0
      %p113 = por %p111, %p112
      %p114 = scmp.ne.s32.totalorder %s106, %s108
      %p115 = scmp.eq.s32.totalorder %s18, 1
      %p116 = por %p114, %p115
      %p117 = scmp.ne.s32.totalorder %s108, %s109
      %p118 = scmp.eq.s32.totalorder %s18, 0
      %p119 = por %p117, %p118
      %p120 = scmp.ne.s32.totalorder %s108, %s109
      %p121 = scmp.eq.s32.totalorder %s19, 1
      %p122 = por %p120, %p121
      %p124 = scmp.ne.s32.totalorder %s109, %s123
      %p125 = scmp.eq.s32.totalorder %s19, 0
      %p126 = por %p124, %p125
      %s128 = sadd.s32 %s127, 1
      %p131 = scmp.eq.s32.totalorder %s13, 1
      %p132 = scmp.ne.s32.totalorder %s127, %s129
      %p133 = scmp.eq.s32.totalorder %s13, 0
      %p134 = por %p132, %p133
      %p135 = scmp.ne.s32.totalorder %s127, %s129
      %p136 = scmp.eq.s32.totalorder %s18, 1
      %p137 = por %p135, %p136
      %p138 = scmp.ne.s32.totalorder %s129, %s130
      %p139 = scmp.eq.s32.totalorder %s18, 0
      %p140 = por %p138, %p139
      %p141 = scmp.ne.s32.totalorder %s129, %s130
      %p142 = scmp.eq.s32.totalorder %s19, 1
      %p143 = por %p141, %p142
      %p145 = scmp.ne.s32.totalorder %s130, %s144
      %p146 = scmp.eq.s32.totalorder %s19, 0
      %p147 = por %p145, %p146
      %s149 = sadd.s32 %s148, 1
      %p152 = scmp.eq.s32.totalorder %s13, 1
      %p153 = scmp.ne.s32.totalorder %s148, %s150
      %p154 = scmp.eq.s32.totalorder %s13, 0
      %p155 = por %p153, %p154
      %p156 = scmp.ne.s32.totalorder %s148, %s150
      %p157 = scmp.eq.s32.totalorder %s18, 1
      %p158 = por %p156, %p157
      %p159 = scmp.ne.s32.totalorder %s150, %s151
      %p160 = scmp.eq.s32.totalorder %s18, 0
      %p161 = por %p159, %p160
      %p162 = scmp.ne.s32.totalorder %s150, %s151
      %p163 = scmp.eq.s32.totalorder %s19, 1
      %p164 = por %p162, %p163
      %p166 = scmp.ne.s32.totalorder %s151, %s165
      %p167 = scmp.eq.s32.totalorder %s19, 0
      %p168 = por %p166, %p167
      %s169 = ssub.s32 %s20, %s32
      %p170 = scmp.eq.s32.totalorder %s169, 0
      %s172 = sadd.s32 %s171, 1
      %s173 = scalar_select %p170, %s171, %s172
      %p176 = pneg %p170
      %p177 = scmp.eq.s32.totalorder %s13, 1
      %p178 = por %p176, %p177
      %p179 = scmp.ne.s32.totalorder %s171, %s174
      %p180 = scmp.eq.s32.totalorder %s13, 0
      %p181 = por %p179, %p180
      %p182 = scmp.ne.s32.totalorder %s171, %s174
      %p183 = scmp.eq.s32.totalorder %s18, 1
      %p184 = por %p182, %p183
      %p185 = scmp.ne.s32.totalorder %s174, %s175
      %p186 = scmp.eq.s32.totalorder %s18, 0
      %p187 = por %p185, %p186
      %p188 = scmp.ne.s32.totalorder %s174, %s175
      %p189 = scmp.eq.s32.totalorder %s19, 1
      %p190 = por %p188, %p189
      %p192 = scmp.ne.s32.totalorder %s175, %s191
      %p193 = scmp.eq.s32.totalorder %s19, 0
      %p194 = por %p192, %p193
      %p195 = scmp.le.s32.totalorder 1, %s13
      %p196 = scmp.lt.s32.totalorder %s13, 3
      %p197 = pnand %p195, %p196
      %p198 = pneg %p197
      // Predicated region
      $region9: #{tpu_custom_call.1} parent=5 // pred_check
        _
      $region10: #{tpu_custom_call.1} parent=5 // pred_check_branch
        %200 = sbr.rel (%p197) target = $region12
      $region11: #{tpu_custom_call.1} parent=5 // pred_region
        %s201 = ssub.s32 %s13, 1
        // Predicated region
        $region13: #{tpu_custom_call.1} parent=11 // pred_check
          %p202 = pneg %p98
        $region14: #{tpu_custom_call.1} parent=11 // pred_check_branch
          %204 = sbr.rel (%p202) target = $region16
        $region15: #{tpu_custom_call.1} parent=11 // pred_region
          _
        $region16: #{tpu_custom_call.1} parent=11 // pred_fallthru
          _
        // Predicated region
        $region17: #{tpu_custom_call.1} parent=11 // pred_check
          %p205 = pneg %p119
        $region18: #{tpu_custom_call.1} parent=11 // pred_check_branch
          %207 = sbr.rel (%p205) target = $region20
        $region19: #{tpu_custom_call.1} parent=11 // pred_region
          _
        $region20: #{tpu_custom_call.1} parent=11 // pred_fallthru
          _
        // Predicated region
        $region21: #{tpu_custom_call.1} parent=11 // pred_check
          %p208 = pneg %p140
        $region22: #{tpu_custom_call.1} parent=11 // pred_check_branch
          %210 = sbr.rel (%p208) target = $region24
        $region23: #{tpu_custom_call.1} parent=11 // pred_region
          _
        $region24: #{tpu_custom_call.1} parent=11 // pred_fallthru
          _
        // Predicated region
        $region25: #{tpu_custom_call.1} parent=11 // pred_check
          %p211 = pneg %p161
        $region26: #{tpu_custom_call.1} parent=11 // pred_check_branch
          %213 = sbr.rel (%p211) target = $region28
        $region27: #{tpu_custom_call.1} parent=11 // pred_region
          _
        $region28: #{tpu_custom_call.1} parent=11 // pred_fallthru
          _
      $region12: #{tpu_custom_call.1} parent=5 // pred_fallthru
        _
      %p214 = scmp.lt.s32.totalorder %s13, 2
      // Predicated region
      $region29: #{tpu_custom_call.1} parent=5 // pred_check
        %p215 = pneg %p214
      $region30: #{tpu_custom_call.1} parent=5 // pred_check_branch
        %217 = sbr.rel (%p215) target = $region32
      $region31: #{tpu_custom_call.1} parent=5 // pred_region
        // Predicated region
        $region33: #{tpu_custom_call.1} parent=31 // pred_check
          %p218 = pneg %p45
        $region34: #{tpu_custom_call.1} parent=31 // pred_check_branch
          %220 = sbr.rel (%p218) target = $region36
        $region35: #{tpu_custom_call.1} parent=31 // pred_region
          %p221 = scmp.lt.s32.totalorder %s21, 1
          %s222 = scalar_select %p221, %s21, 1
          %s223 = scalar_lea.vmem %s0, %s222
        $region36: #{tpu_custom_call.1} parent=31 // pred_fallthru
          _
        // Predicated region
        $region37: #{tpu_custom_call.1} parent=31 // pred_check
          %p224 = pneg %p71
        $region38: #{tpu_custom_call.1} parent=31 // pred_check_branch
          %226 = sbr.rel (%p224) target = $region40
        $region39: #{tpu_custom_call.1} parent=31 // pred_region
          %s227 = smul.u32 16, %s21
          %s228 = ssub.s32 25, %s227
          %p229 = scmp.lt.s32.totalorder %s228, 16
          %s230 = scalar_select %p229, %s228, 16
          %s231 = smul.u32 8, %s230
          %p232 = scmp.lt.s32.totalorder %s227, 24
          %s233 = scalar_select %p232, %s227, 24
          %s234 = smul.addr %s233, 8
          %s235 = scalar_lea.vmem %s1, %s234
          %s236 = smul.u32 16, %s21
          %s237 = ssub.s32 25, %s236
          %p238 = scmp.lt.s32.totalorder %s237, 16
          %s239 = scalar_select %p238, %s237, 16
          %s240 = smul.u32 8, %s239
        $region40: #{tpu_custom_call.1} parent=31 // pred_fallthru
          _
      $region32: #{tpu_custom_call.1} parent=5 // pred_fallthru
        _
      %p241 = scmp.le.s32.totalorder 1, %s13
      %p242 = scmp.lt.s32.totalorder %s13, 3
      %p243 = pnand %p241, %p242
      %p244 = pneg %p243
      // Predicated region
      $region41: #{tpu_custom_call.1} parent=5 // pred_check
        _
      $region42: #{tpu_custom_call.1} parent=5 // pred_check_branch
        %246 = sbr.rel (%p243) target = $region44
      $region43: #{tpu_custom_call.1} parent=5 // pred_region
        %s247 = ssub.s32 %s13, 1
        %p248 = scmp.lt.s32.totalorder %s23, 1
        %s249 = scalar_select %p248, %s23, 1
        %s250 = scalar_lea.vmem %s0, %s249
        %p251 = pneg %p51
        %p252 = pneg %p48
        %s253 = smul.u32 16, %s23
        %s254 = ssub.s32 25, %s253
        %p255 = scmp.lt.s32.totalorder %s254, 16
        %s256 = scalar_select %p255, %s254, 16
        %s257 = smul.u32 8, %s256
        %p258 = scmp.lt.s32.totalorder %s253, 24
        %s259 = scalar_select %p258, %s253, 24
        %s260 = smul.addr %s259, 8
        %s261 = scalar_lea.vmem %s1, %s260
        %p262 = pneg %p77
        %p263 = pneg %p74
        %p264 = pneg %p98
        %p265 = pneg %p95
        %p266 = pneg %p119
        %p267 = pneg %p116
        %p268 = pneg %p140
        %p269 = pneg %p137
        %p270 = pneg %p161
        %p271 = pneg %p158
        %p272 = pneg %p187
        %p273 = pneg %p184
        %p274 = scmp.lt.s32.totalorder %s23, 1
        %s275 = scalar_select %p274, %s23, 1
        %s276 = scalar_lea.vmem %s0, %s275
        %s277 = smul.u32 16, %s23
        %s278 = ssub.s32 25, %s277
        %p279 = scmp.lt.s32.totalorder %s278, 16
        %s280 = scalar_select %p279, %s278, 16
        %s281 = smul.u32 8, %s280
        %p282 = scmp.lt.s32.totalorder %s277, 24
        %s283 = scalar_select %p282, %s277, 24
        %s284 = smul.addr %s283, 8
        %s285 = scalar_lea.vmem %s1, %s284
        %s286 = smul.u32 16, %s23
        %s287 = ssub.s32 25, %s286
        %p288 = scmp.lt.s32.totalorder %s287, 16
        %s289 = scalar_select %p288, %s287, 16
        %s290 = smul.u32 8, %s289
        %s291 = smul.u32 2, %s22
        %p292 = scmp.eq.s32.totalorder %s23, 0
        // Predicated region
        $region45: #{tpu_custom_call.1} parent=43 // pred_check
          %p293 = pneg %p292
        $region46: #{tpu_custom_call.1} parent=43 // pred_check_branch
          %295 = sbr.rel (%p293) target = $region48
        $region47: #{tpu_custom_call.1} parent=43 // pred_region
          %vm296 = vcmask 31744
          %297 = vst.msk [vmem:[#allocation2] sm:$0xff] %vm296, -1e+30
          %298 = vst.msk [vmem:[#allocation2 + $0x8] sm:$0xff] %vm296, -1e+30
          %299 = vst.msk [vmem:[#allocation3] sm:$0xff] %vm296, 0.0
          %300 = vst.msk [vmem:[#allocation3 + $0x8] sm:$0xff] %vm296, 0.0
          %vm301 = vcmask 261120
          %302 = vst.msk [vmem:[#allocation4] sm:$0xff] %vm301, 0.0
          %303 = vst.msk [vmem:[#allocation4 + $0x8] sm:$0xff] %vm301, 0.0
        $region48: #{tpu_custom_call.1} parent=43 // pred_fallthru
          _
        %v304 = vld [vmem:[%s285] sm:$0xff]
        %v305 = vld [vmem:[%s285 + $0x8] sm:$0xff]
        %v306 = vld [vmem:[%s285 + $0x10] sm:$0xff]
        %v307 = vld [vmem:[%s285 + $0x18] sm:$0xff]
        %v308 = vld [vmem:[%s285 + $0x20] sm:$0xff]
        %v309 = vld [vmem:[%s285 + $0x28] sm:$0xff]
        %v310 = vld [vmem:[%s285 + $0x30] sm:$0xff]
        %v311 = vld [vmem:[%s285 + $0x38] sm:$0xff]
        %v312 = vld [vmem:[%s285 + $0x40] sm:$0xff]
        %v313 = vld [vmem:[%s285 + $0x48] sm:$0xff]
        %v314 = vld [vmem:[%s285 + $0x50] sm:$0xff]
        %v315 = vld [vmem:[%s285 + $0x58] sm:$0xff]
        %v316 = vld [vmem:[%s285 + $0x60] sm:$0xff]
        %v317 = vld [vmem:[%s285 + $0x68] sm:$0xff]
        %v318 = vld [vmem:[%s285 + $0x70] sm:$0xff]
        %v319 = vld [vmem:[%s285 + $0x78] sm:$0xff]
        %v320 = vld [vmem:[%s276] sm:$0x1]
        %v321 = vlaneseq
        %v322 = vshrl.u32 %v321, 7
        %v323 = vadd.s32 %v322, 8
        %v324 = vadd.s32 %v322, 16
        %v325 = vadd.s32 %v322, 24
        %v326 = vadd.s32 %v322, 32
        %v327 = vadd.s32 %v322, 40
        %v328 = vadd.s32 %v322, 48
        %v329 = vadd.s32 %v322, 56
        %v330 = vadd.s32 %v322, 64
        %v331 = vadd.s32 %v322, 72
        %v332 = vadd.s32 %v322, 80
        %v333 = vadd.s32 %v322, 88
        %v334 = vadd.s32 %v322, 96
        %v335 = vadd.s32 %v322, 104
        %v336 = vadd.s32 %v322, 112
        %v337 = vadd.s32 %v322, 120
        %v338 = vlaneseq
        %v339 = vand.u32 %v338, 127
        %s340 = smul.u32 %s23, 128
        %v341 = vstv %s340
        %v342 = vadd.s32 %v341, %v322
        %v343 = vadd.s32 %v341, %v323
        %v344 = vadd.s32 %v341, %v324
        %v345 = vadd.s32 %v341, %v325
        %v346 = vadd.s32 %v341, %v326
        %v347 = vadd.s32 %v341, %v327
        %v348 = vadd.s32 %v341, %v328
        %v349 = vadd.s32 %v341, %v329
        %v350 = vadd.s32 %v341, %v330
        %v351 = vadd.s32 %v341, %v331
        %v352 = vadd.s32 %v341, %v332
        %v353 = vadd.s32 %v341, %v333
        %v354 = vadd.s32 %v341, %v334
        %v355 = vadd.s32 %v341, %v335
        %v356 = vadd.s32 %v341, %v336
        %v357 = vadd.s32 %v341, %v337
        %vm358 = vcmp.lt.s32.totalorder %v342, 200
        %vm359 = vcmp.lt.s32.totalorder %v343, 200
        %vm360 = vcmp.lt.s32.totalorder %v344, 200
        %vm361 = vcmp.lt.s32.totalorder %v345, 200
        %vm362 = vcmp.lt.s32.totalorder %v346, 200
        %vm363 = vcmp.lt.s32.totalorder %v347, 200
        %vm364 = vcmp.lt.s32.totalorder %v348, 200
        %vm365 = vcmp.lt.s32.totalorder %v349, 200
        %vm366 = vcmp.lt.s32.totalorder %v350, 200
        %vm367 = vcmp.lt.s32.totalorder %v351, 200
        %vm368 = vcmp.lt.s32.totalorder %v352, 200
        %vm369 = vcmp.lt.s32.totalorder %v353, 200
        %vm370 = vcmp.lt.s32.totalorder %v354, 200
        %vm371 = vcmp.lt.s32.totalorder %v355, 200
        %vm372 = vcmp.lt.s32.totalorder %v356, 200
        %vm373 = vcmp.lt.s32.totalorder %v357, 200
        %v374 = vadd.s32 %v341, %v339
        %vm375 = vcmp.lt.s32.totalorder %v374, 200
        %v376 = vld [vmem:[%s2] sm:$0xff]
        %v377 = vld [vmem:[%s2 + $0x8] sm:$0xff]
        %v378 = vld [vmem:[%s2 + $0x10] sm:$0xff]
        %v379 = vld [vmem:[%s2 + $0x18] sm:$0xff]
        %v380 = vld [vmem:[%s2 + $0x20] sm:$0xff]
        %v381 = vld [vmem:[%s2 + $0x28] sm:$0xff]
        %v382 = vld [vmem:[%s2 + $0x30] sm:$0xff]
        %v383 = vld [vmem:[%s2 + $0x38] sm:$0xff]
        %v384 = vld [vmem:[%s2 + $0x40] sm:$0xff]
        %v385 = vld [vmem:[%s2 + $0x48] sm:$0xff]
        %v386 = vld [vmem:[%s2 + $0x50] sm:$0xff]
        %v387 = vld [vmem:[%s2 + $0x58] sm:$0xff]
        %v388 = vld [vmem:[%s3] sm:$0x1]
        %v390 = vperm.slane %v388, 0
        %vm392 = vcmask 785408
        %v394 = vsel %vm392, %v304, 0
        %v397 = vsel %vm392, %v305, 0
        %v400 = vsel %vm392, %v306, 0
        %v403 = vsel %vm392, %v307, 0
        %v406 = vsel %vm392, %v308, 0
        %v409 = vsel %vm392, %v309, 0
        %v412 = vsel %vm392, %v310, 0
        %v415 = vsel %vm392, %v311, 0
        %v418 = vsel %vm392, %v312, 0
        %v421 = vsel %vm392, %v313, 0
        %v424 = vsel %vm392, %v314, 0
        %v427 = vsel %vm392, %v315, 0
        %v430 = vsel %vm392, %v316, 0
        %v433 = vsel %vm392, %v317, 0
        %v436 = vsel %vm392, %v318, 0
        %v439 = vsel %vm392, %v319, 0
        %441 = vmatpush.msra.mxu0 0.0
        %442 = vmatpush.msra.mxu0 0.0
        %443 = vmatpush.msra.mxu0 0.0
        %444 = vmatpush.msra.mxu0 0.0
        %445 = vmatpush.msra.mxu0 %v387
        %446 = vmatpush.msra.mxu0 %v386
        %447 = vmatpush.msra.mxu0 %v385
        %448 = vmatpush.msra.mxu0 %v384
        %449 = vmatpush.msra.mxu0 %v383
        %450 = vmatpush.msra.mxu0 %v382
        %451 = vmatpush.msra.mxu0 %v381
        %452 = vmatpush.msra.mxu0 %v380
        %453 = vmatpush.msra.mxu0 %v379
        %454 = vmatpush.msra.mxu0 %v378
        %455 = vmatpush.msra.mxu0 %v377
        %456 = vmatpush.msra.mxu0 %v376
        %457 = vmatmul.f32.gmra.mxu0 %v394
        %v458 = vpop.f32.mrf.mxu0
        %v459 = vadd.f32 %v390, %v458
        %460 = vmatmul.f32.gmra.mxu0 %v397
        %v461 = vpop.f32.mrf.mxu0
        %v462 = vadd.f32 %v390, %v461
        %463 = vmatmul.f32.gmra.mxu0 %v400
        %v464 = vpop.f32.mrf.mxu0
        %v465 = vadd.f32 %v390, %v464
        %466 = vmatmul.f32.gmra.mxu0 %v403
        %v467 = vpop.f32.mrf.mxu0
        %v468 = vadd.f32 %v390, %v467
        %469 = vmatmul.f32.gmra.mxu0 %v406
        %v470 = vpop.f32.mrf.mxu0
        %v471 = vadd.f32 %v390, %v470
        %472 = vmatmul.f32.gmra.mxu0 %v409
        %v473 = vpop.f32.mrf.mxu0
        %v474 = vadd.f32 %v390, %v473
        %475 = vmatmul.f32.gmra.mxu0 %v412
        %v476 = vpop.f32.mrf.mxu0
        %v477 = vadd.f32 %v390, %v476
        %478 = vmatmul.f32.gmra.mxu0 %v415
        %v479 = vpop.f32.mrf.mxu0
        %v480 = vadd.f32 %v390, %v479
        %481 = vmatmul.f32.gmra.mxu0 %v418
        %v482 = vpop.f32.mrf.mxu0
        %v483 = vadd.f32 %v390, %v482
        %484 = vmatmul.f32.gmra.mxu0 %v421
        %v485 = vpop.f32.mrf.mxu0
        %v486 = vadd.f32 %v390, %v485
        %487 = vmatmul.f32.gmra.mxu0 %v424
        %v488 = vpop.f32.mrf.mxu0
        %v489 = vadd.f32 %v390, %v488
        %490 = vmatmul.f32.gmra.mxu0 %v427
        %v491 = vpop.f32.mrf.mxu0
        %v492 = vadd.f32 %v390, %v491
        %493 = vmatmul.f32.gmra.mxu0 %v430
        %v494 = vpop.f32.mrf.mxu0
        %v495 = vadd.f32 %v390, %v494
        %496 = vmatmul.f32.gmra.mxu0 %v433
        %v497 = vpop.f32.mrf.mxu0
        %v498 = vadd.f32 %v390, %v497
        %499 = vmatmul.f32.gmra.mxu0 %v436
        %v500 = vpop.f32.mrf.mxu0
        %v501 = vadd.f32 %v390, %v500
        %502 = vmatmul.f32.gmra.mxu0 %v439
        %v503 = vpop.f32.mrf.mxu0
        %v504 = vadd.f32 %v390, %v503
        %505 = vdwg.mxu0
        %vm506 = vcmp.ge.f32.partialorder %v459, 0.0
        %vm507 = vcmp.ge.f32.partialorder %v462, 0.0
        %vm508 = vcmp.ge.f32.partialorder %v465, 0.0
        %vm509 = vcmp.ge.f32.partialorder %v468, 0.0
        %vm510 = vcmp.ge.f32.partialorder %v471, 0.0
        %vm511 = vcmp.ge.f32.partialorder %v474, 0.0
        %vm512 = vcmp.ge.f32.partialorder %v477, 0.0
        %vm513 = vcmp.ge.f32.partialorder %v480, 0.0
        %vm514 = vcmp.ge.f32.partialorder %v483, 0.0
        %vm515 = vcmp.ge.f32.partialorder %v486, 0.0
        %vm516 = vcmp.ge.f32.partialorder %v489, 0.0
        %vm517 = vcmp.ge.f32.partialorder %v492, 0.0
        %vm518 = vcmp.ge.f32.partialorder %v495, 0.0
        %vm519 = vcmp.ge.f32.partialorder %v498, 0.0
        %vm520 = vcmp.ge.f32.partialorder %v501, 0.0
        %vm521 = vcmp.ge.f32.partialorder %v504, 0.0
        %v522 = vmul.f32 %v459, 0.01
        %v523 = vmul.f32 %v462, 0.01
        %v524 = vmul.f32 %v465, 0.01
        %v525 = vmul.f32 %v468, 0.01
        %v526 = vmul.f32 %v471, 0.01
        %v527 = vmul.f32 %v474, 0.01
        %v528 = vmul.f32 %v477, 0.01
        %v529 = vmul.f32 %v480, 0.01
        %v530 = vmul.f32 %v483, 0.01
        %v531 = vmul.f32 %v486, 0.01
        %v532 = vmul.f32 %v489, 0.01
        %v533 = vmul.f32 %v492, 0.01
        %v534 = vmul.f32 %v495, 0.01
        %v535 = vmul.f32 %v498, 0.01
        %v536 = vmul.f32 %v501, 0.01
        %v537 = vmul.f32 %v504, 0.01
        %v538 = vsel %vm506, %v459, %v522
        %v539 = vsel %vm507, %v462, %v523
        %v540 = vsel %vm508, %v465, %v524
        %v541 = vsel %vm509, %v468, %v525
        %v542 = vsel %vm510, %v471, %v526
        %v543 = vsel %vm511, %v474, %v527
        %v544 = vsel %vm512, %v477, %v528
        %v545 = vsel %vm513, %v480, %v529
        %v546 = vsel %vm514, %v483, %v530
        %v547 = vsel %vm515, %v486, %v531
        %v548 = vsel %vm516, %v489, %v532
        %v549 = vsel %vm517, %v492, %v533
        %v550 = vsel %vm518, %v495, %v534
        %v551 = vsel %vm519, %v498, %v535
        %v552 = vsel %vm520, %v501, %v536
        %v553 = vsel %vm521, %v504, %v537
        %v554 = vld [vmem:[%s4] sm:$0xff]
        %v555 = vld [vmem:[%s4 + $0x8] sm:$0xff]
        %v556 = vld [vmem:[%s4 + $0x10] sm:$0xff]
        %v557 = vld [vmem:[%s4 + $0x18] sm:$0xff]
        %vm558 = vcmask 261120
        %v560 = vsel %vm558, %v538, 0
        %v563 = vsel %vm558, %v539, 0
        %v566 = vsel %vm558, %v540, 0
        %v569 = vsel %vm558, %v541, 0
        %v572 = vsel %vm558, %v542, 0
        %v575 = vsel %vm558, %v543, 0
        %v578 = vsel %vm558, %v544, 0
        %v581 = vsel %vm558, %v545, 0
        %v584 = vsel %vm558, %v546, 0
        %v587 = vsel %vm558, %v547, 0
        %v590 = vsel %vm558, %v548, 0
        %v593 = vsel %vm558, %v549, 0
        %v596 = vsel %vm558, %v550, 0
        %v599 = vsel %vm558, %v551, 0
        %v602 = vsel %vm558, %v552, 0
        %v605 = vsel %vm558, %v553, 0
        %607 = vmatpush.msra.mxu0 0.0
        %608 = vmatpush.msra.mxu0 0.0
        %609 = vmatpush.msra.mxu0 0.0
        %610 = vmatpush.msra.mxu0 0.0
        %611 = vmatpush.msra.mxu0 0.0
        %612 = vmatpush.msra.mxu0 0.0
        %613 = vmatpush.msra.mxu0 0.0
        %614 = vmatpush.msra.mxu0 0.0
        %615 = vmatpush.msra.mxu0 0.0
        %616 = vmatpush.msra.mxu0 0.0
        %617 = vmatpush.msra.mxu0 0.0
        %618 = vmatpush.msra.mxu0 0.0
        %619 = vmatpush.msra.mxu0 %v557
        %620 = vmatpush.msra.mxu0 %v556
        %621 = vmatpush.msra.mxu0 %v555
        %622 = vmatpush.msra.mxu0 %v554
        %623 = vmatmul.f32.gmra.mxu0 %v560
        %v624 = vpop.f32.mrf.mxu0
        %v625 = vadd.f32 0.0, %v624
        %626 = vmatmul.f32.gmra.mxu0 %v563
        %v627 = vpop.f32.mrf.mxu0
        %v628 = vadd.f32 0.0, %v627
        %629 = vmatmul.f32.gmra.mxu0 %v566
        %v630 = vpop.f32.mrf.mxu0
        %v631 = vadd.f32 0.0, %v630
        %632 = vmatmul.f32.gmra.mxu0 %v569
        %v633 = vpop.f32.mrf.mxu0
        %v634 = vadd.f32 0.0, %v633
        %635 = vmatmul.f32.gmra.mxu0 %v572
        %v636 = vpop.f32.mrf.mxu0
        %v637 = vadd.f32 0.0, %v636
        %638 = vmatmul.f32.gmra.mxu0 %v575
        %v639 = vpop.f32.mrf.mxu0
        %v640 = vadd.f32 0.0, %v639
        %641 = vmatmul.f32.gmra.mxu0 %v578
        %v642 = vpop.f32.mrf.mxu0
        %v643 = vadd.f32 0.0, %v642
        %644 = vmatmul.f32.gmra.mxu0 %v581
        %v645 = vpop.f32.mrf.mxu0
        %v646 = vadd.f32 0.0, %v645
        %647 = vmatmul.f32.gmra.mxu0 %v584
        %v648 = vpop.f32.mrf.mxu0
        %v649 = vadd.f32 0.0, %v648
        %650 = vmatmul.f32.gmra.mxu0 %v587
        %v651 = vpop.f32.mrf.mxu0
        %v652 = vadd.f32 0.0, %v651
        %653 = vmatmul.f32.gmra.mxu0 %v590
        %v654 = vpop.f32.mrf.mxu0
        %v655 = vadd.f32 0.0, %v654
        %656 = vmatmul.f32.gmra.mxu0 %v593
        %v657 = vpop.f32.mrf.mxu0
        %v658 = vadd.f32 0.0, %v657
        %659 = vmatmul.f32.gmra.mxu0 %v596
        %v660 = vpop.f32.mrf.mxu0
        %v661 = vadd.f32 0.0, %v660
        %662 = vmatmul.f32.gmra.mxu0 %v599
        %v663 = vpop.f32.mrf.mxu0
        %v664 = vadd.f32 0.0, %v663
        %665 = vmatmul.f32.gmra.mxu0 %v602
        %v666 = vpop.f32.mrf.mxu0
        %v667 = vadd.f32 0.0, %v666
        %668 = vmatmul.f32.gmra.mxu0 %v605
        %v669 = vpop.f32.mrf.mxu0
        %v670 = vadd.f32 0.0, %v669
        %671 = vdwg.mxu0
        %v672 = vsel %vm358, 1, 0
        %v673 = vsel %vm359, 1, 0
        %v674 = vsel %vm360, 1, 0
        %v675 = vsel %vm361, 1, 0
        %v676 = vsel %vm362, 1, 0
        %v677 = vsel %vm363, 1, 0
        %v678 = vsel %vm364, 1, 0
        %v679 = vsel %vm365, 1, 0
        %v680 = vsel %vm366, 1, 0
        %v681 = vsel %vm367, 1, 0
        %v682 = vsel %vm368, 1, 0
        %v683 = vsel %vm369, 1, 0
        %v684 = vsel %vm370, 1, 0
        %v685 = vsel %vm371, 1, 0
        %v686 = vsel %vm372, 1, 0
        %v687 = vsel %vm373, 1, 0
        %vm688 = vcmp.eq.s32.totalorder %v672, 1
        %vm689 = vcmp.eq.s32.totalorder %v673, 1
        %vm690 = vcmp.eq.s32.totalorder %v674, 1
        %vm691 = vcmp.eq.s32.totalorder %v675, 1
        %vm692 = vcmp.eq.s32.totalorder %v676, 1
        %vm693 = vcmp.eq.s32.totalorder %v677, 1
        %vm694 = vcmp.eq.s32.totalorder %v678, 1
        %vm695 = vcmp.eq.s32.totalorder %v679, 1
        %vm696 = vcmp.eq.s32.totalorder %v680, 1
        %vm697 = vcmp.eq.s32.totalorder %v681, 1
        %vm698 = vcmp.eq.s32.totalorder %v682, 1
        %vm699 = vcmp.eq.s32.totalorder %v683, 1
        %vm700 = vcmp.eq.s32.totalorder %v684, 1
        %vm701 = vcmp.eq.s32.totalorder %v685, 1
        %vm702 = vcmp.eq.s32.totalorder %v686, 1
        %vm703 = vcmp.eq.s32.totalorder %v687, 1
        %v704 = vsel %vm688, %v625, -1e+30
        %v705 = vsel %vm689, %v628, -1e+30
        %v706 = vsel %vm690, %v631, -1e+30
        %v707 = vsel %vm691, %v634, -1e+30
        %v708 = vsel %vm692, %v637, -1e+30
        %v709 = vsel %vm693, %v640, -1e+30
        %v710 = vsel %vm694, %v643, -1e+30
        %v711 = vsel %vm695, %v646, -1e+30
        %v712 = vsel %vm696, %v649, -1e+30
        %v713 = vsel %vm697, %v652, -1e+30
        %v714 = vsel %vm698, %v655, -1e+30
        %v715 = vsel %vm699, %v658, -1e+30
        %v716 = vsel %vm700, %v661, -1e+30
        %v717 = vsel %vm701, %v664, -1e+30
        %v718 = vsel %vm702, %v667, -1e+30
        %v719 = vsel %vm703, %v670, -1e+30
        %s720 = smul.u32 %s22, 16
        %v721 = vstv %s720
        %v722 = vadd.s32 %v322, %v721
        %v723 = vadd.s32 %v323, %v721
        %v724 = vperm.slane %v320, 0
        %vm725 = vcmp.eq.s32.totalorder %v722, %v724
        %vm726 = vcmp.eq.s32.totalorder %v723, %v724
        %v727 = vsel %vm375, 1, 0
        %vm728 = vcmp.eq.s32.totalorder %v727, 1
        %vm729 = vmand %vm725, %vm728
        %vm730 = vmand %vm726, %vm728
        %v731 = vsel %vm729, 1, 0
        %v732 = vsel %vm730, 1, 0
        %v733 = vcvt.s32.f32 %v731
        %v734 = vcvt.s32.f32 %v732
        %vm735 = vcmp.eq.s32.totalorder %v322, %v339
        %v736 = vsel %vm735, 1, 0
        %v737 = vcvt.s32.f32 %v736
        %vm738 = vcmask 31744
        %v740 = vsel %vm738, %v737, 0
        %v743 = vsel %vm738, %v704, 0
        %v746 = vsel %vm738, %v705, 0
        %v749 = vsel %vm738, %v706, 0
        %v752 = vsel %vm738, %v707, 0
        %v755 = vsel %vm738, %v708, 0
        %v758 = vsel %vm738, %v709, 0
        %v761 = vsel %vm738, %v710, 0
        %v764 = vsel %vm738, %v711, 0
        %v767 = vsel %vm738, %v712, 0
        %v770 = vsel %vm738, %v713, 0
        %v773 = vsel %vm738, %v714, 0
        %v776 = vsel %vm738, %v715, 0
        %v779 = vsel %vm738, %v716, 0
        %v782 = vsel %vm738, %v717, 0
        %v785 = vsel %vm738, %v718, 0
        %v788 = vsel %vm738, %v719, 0
        %790 = vmatpush.xpose.msra.mxu0 %v788
        %791 = vmatpush.xpose.msra.mxu0 %v785
        %792 = vmatpush.xpose.msra.mxu0 %v782
        %793 = vmatpush.xpose.msra.mxu0 %v779
        %794 = vmatpush.xpose.msra.mxu0 %v776
        %795 = vmatpush.xpose.msra.mxu0 %v773
        %796 = vmatpush.xpose.msra.mxu0 %v770
        %797 = vmatpush.xpose.msra.mxu0 %v767
        %798 = vmatpush.xpose.msra.mxu0 %v764
        %799 = vmatpush.xpose.msra.mxu0 %v761
        %800 = vmatpush.xpose.msra.mxu0 %v758
        %801 = vmatpush.xpose.msra.mxu0 %v755
        %802 = vmatpush.xpose.msra.mxu0 %v752
        %803 = vmatpush.xpose.msra.mxu0 %v749
        %804 = vmatpush.xpose.msra.mxu0 %v746
        %805 = vmatpush.xpose.msra.mxu0 %v743
        %806 = vmatmul.f32.gmra.mxu0 %v740
        %v807 = vpop.f32.mrf.mxu0
        %v808 = vadd.f32 0.0, %v807
        %809 = vdwg.mxu0
        %v810 = vrot.slane %v731, 1
        %v811 = vrot.slane %v731, 2
        %v812 = vrot.slane %v731, 3
        %v813 = vrot.slane %v731, 4
        %v814 = vrot.slane %v731, 5
        %v815 = vrot.slane %v731, 6
        %v816 = vrot.slane %v731, 7
        %v817 = vrot.slane %v732, 1
        %v818 = vrot.slane %v732, 2
        %v819 = vrot.slane %v732, 3
        %v820 = vrot.slane %v732, 4
        %v821 = vrot.slane %v732, 5
        %v822 = vrot.slane %v732, 6
        %v823 = vrot.slane %v732, 7
        %vm824 = vcmp.ne.s32.totalorder %v810, 0
        %vm825 = vcmp.ne.s32.totalorder %v811, 0
        %vm826 = vcmp.ne.s32.totalorder %v812, 0
        %vm827 = vcmp.ne.s32.totalorder %v813, 0
        %vm828 = vcmp.ne.s32.totalorder %v814, 0
        %vm829 = vcmp.ne.s32.totalorder %v815, 0
        %vm830 = vcmp.ne.s32.totalorder %v816, 0
        %vm831 = vcmp.ne.s32.totalorder %v817, 0
        %vm832 = vcmp.ne.s32.totalorder %v818, 0
        %vm833 = vcmp.ne.s32.totalorder %v819, 0
        %vm834 = vcmp.ne.s32.totalorder %v820, 0
        %vm835 = vcmp.ne.s32.totalorder %v821, 0
        %vm836 = vcmp.ne.s32.totalorder %v822, 0
        %vm837 = vcmp.ne.s32.totalorder %v823, 0
        %v838 = vsel %vm824, 1, 0
        %v839 = vsel %vm825, 1, 0
        %v840 = vsel %vm826, 1, 0
        %v841 = vsel %vm827, 1, 0
        %v842 = vsel %vm828, 1, 0
        %v843 = vsel %vm829, 1, 0
        %v844 = vsel %vm830, 1, 0
        %v845 = vsel %vm831, 1, 0
        %v846 = vsel %vm832, 1, 0
        %v847 = vsel %vm833, 1, 0
        %v848 = vsel %vm834, 1, 0
        %v849 = vsel %vm835, 1, 0
        %v850 = vsel %vm836, 1, 0
        %v851 = vsel %vm837, 1, 0
        %v852 = vperm.slane %v731, 0
        %v853 = vperm.slane %v838, 0
        %v854 = vperm.slane %v839, 0
        %v855 = vperm.slane %v840, 0
        %v856 = vperm.slane %v841, 0
        %v857 = vperm.slane %v842, 0
        %v858 = vperm.slane %v843, 0
        %v859 = vperm.slane %v844, 0
        %v860 = vperm.slane %v732, 0
        %v861 = vperm.slane %v845, 0
        %v862 = vperm.slane %v846, 0
        %v863 = vperm.slane %v847, 0
        %v864 = vperm.slane %v848, 0
        %v865 = vperm.slane %v849, 0
        %v866 = vperm.slane %v850, 0
        %v867 = vperm.slane %v851, 0
        %vm868 = vcmp.eq.s32.totalorder %v852, 1
        %vm869 = vcmp.eq.s32.totalorder %v853, 1
        %vm870 = vcmp.eq.s32.totalorder %v854, 1
        %vm871 = vcmp.eq.s32.totalorder %v855, 1
        %vm872 = vcmp.eq.s32.totalorder %v856, 1
        %vm873 = vcmp.eq.s32.totalorder %v857, 1
        %vm874 = vcmp.eq.s32.totalorder %v858, 1
        %vm875 = vcmp.eq.s32.totalorder %v859, 1
        %vm876 = vcmp.eq.s32.totalorder %v860, 1
        %vm877 = vcmp.eq.s32.totalorder %v861, 1
        %vm878 = vcmp.eq.s32.totalorder %v862, 1
        %vm879 = vcmp.eq.s32.totalorder %v863, 1
        %vm880 = vcmp.eq.s32.totalorder %v864, 1
        %vm881 = vcmp.eq.s32.totalorder %v865, 1
        %vm882 = vcmp.eq.s32.totalorder %v866, 1
        %vm883 = vcmp.eq.s32.totalorder %v867, 1
        %v884 = vsel %vm868, %v808, -1e+30
        %v885 = vsel %vm869, %v808, -1e+30
        %v886 = vsel %vm870, %v808, -1e+30
        %v887 = vsel %vm871, %v808, -1e+30
        %v888 = vsel %vm872, %v808, -1e+30
        %v889 = vsel %vm873, %v808, -1e+30
        %v890 = vsel %vm874, %v808, -1e+30
        %v891 = vsel %vm875, %v808, -1e+30
        %v892 = vsel %vm876, %v808, -1e+30
        %v893 = vsel %vm877, %v808, -1e+30
        %v894 = vsel %vm878, %v808, -1e+30
        %v895 = vsel %vm879, %v808, -1e+30
        %v896 = vsel %vm880, %v808, -1e+30
        %v897 = vsel %vm881, %v808, -1e+30
        %v898 = vsel %vm882, %v808, -1e+30
        %v899 = vsel %vm883, %v808, -1e+30
        %vm900 = vcmask 1043456
        %v901 = vsel %vm900, %v884, -inf
        %902 = vmax.xlane.f32.xlu0 %v901
        %v903 = vpop.xlane.xlu0 %902
        %v904 = vsel %vm900, %v885, -inf
        %905 = vmax.xlane.f32.xlu0 %v904
        %v906 = vpop.xlane.xlu0 %905
        %v907 = vsel %vm900, %v886, -inf
        %908 = vmax.xlane.f32.xlu0 %v907
        %v909 = vpop.xlane.xlu0 %908
        %v910 = vsel %vm900, %v887, -inf
        %911 = vmax.xlane.f32.xlu0 %v910
        %v912 = vpop.xlane.xlu0 %911
        %v913 = vsel %vm900, %v888, -inf
        %914 = vmax.xlane.f32.xlu0 %v913
        %v915 = vpop.xlane.xlu0 %914
        %v916 = vsel %vm900, %v889, -inf
        %917 = vmax.xlane.f32.xlu0 %v916
        %v918 = vpop.xlane.xlu0 %917
        %v919 = vsel %vm900, %v890, -inf
        %920 = vmax.xlane.f32.xlu0 %v919
        %v921 = vpop.xlane.xlu0 %920
        %v922 = vsel %vm900, %v891, -inf
        %923 = vmax.xlane.f32.xlu0 %v922
        %v924 = vpop.xlane.xlu0 %923
        %v925 = vsel %vm900, %v892, -inf
        %926 = vmax.xlane.f32.xlu0 %v925
        %v927 = vpop.xlane.xlu0 %926
        %v928 = vsel %vm900, %v893, -inf
        %929 = vmax.xlane.f32.xlu0 %v928
        %v930 = vpop.xlane.xlu0 %929
        %v931 = vsel %vm900, %v894, -inf
        %932 = vmax.xlane.f32.xlu0 %v931
        %v933 = vpop.xlane.xlu0 %932
        %v934 = vsel %vm900, %v895, -inf
        %935 = vmax.xlane.f32.xlu0 %v934
        %v936 = vpop.xlane.xlu0 %935
        %v937 = vsel %vm900, %v896, -inf
        %938 = vmax.xlane.f32.xlu0 %v937
        %v939 = vpop.xlane.xlu0 %938
        %v940 = vsel %vm900, %v897, -inf
        %941 = vmax.xlane.f32.xlu0 %v940
        %v942 = vpop.xlane.xlu0 %941
        %v943 = vsel %vm900, %v898, -inf
        %944 = vmax.xlane.f32.xlu0 %v943
        %v945 = vpop.xlane.xlu0 %944
        %v946 = vsel %vm900, %v899, -inf
        %947 = vmax.xlane.f32.xlu0 %v946
        %v948 = vpop.xlane.xlu0 %947
        %v949 = vld [vmem:[#allocation2] sm:$0xff]
        %v950 = vld [vmem:[#allocation2 + $0x8] sm:$0xff]
        %v967 = vperm.slane %v903, %v339
        %v968 = vperm.slane %v906, %v339
        %v969 = vperm.slane %v909, %v339
        %v970 = vperm.slane %v912, %v339
        %v971 = vperm.slane %v915, %v339
        %v972 = vperm.slane %v918, %v339
        %v973 = vperm.slane %v921, %v339
        %v974 = vperm.slane %v924, %v339
        %v975 = vperm.slane %v927, %v339
        %v976 = vperm.slane %v930, %v339
        %v977 = vperm.slane %v933, %v339
        %v978 = vperm.slane %v936, %v339
        %v979 = vperm.slane %v939, %v339
        %v980 = vperm.slane %v942, %v339
        %v981 = vperm.slane %v945, %v339
        %v982 = vperm.slane %v948, %v339
        %vm983 = vcmask 1041409
        %v984 = vsel %vm983, %v968, %v967
        %vm985 = vcmask 1042434
        %v986 = vsel %vm985, %v969, %v984
        %vm987 = vcmask 1043459
        %v988 = vsel %vm987, %v970, %v986
        %vm989 = vcmask 1044484
        %v990 = vsel %vm989, %v971, %v988
        %vm991 = vcmask 1045509
        %v992 = vsel %vm991, %v972, %v990
        %vm993 = vcmask 1046534
        %v994 = vsel %vm993, %v973, %v992
        %vm995 = vcmask 1047559
        %v996 = vsel %vm995, %v974, %v994
        %v997 = vsel %vm983, %v976, %v975
        %v998 = vsel %vm985, %v977, %v997
        %v999 = vsel %vm987, %v978, %v998
        %v1000 = vsel %vm989, %v979, %v999
        %v1001 = vsel %vm991, %v980, %v1000
        %v1002 = vsel %vm993, %v981, %v1001
        %v1003 = vsel %vm995, %v982, %v1002
        %v1006 = vmax.f32 %v949, %v996
        %v1007 = vmax.f32 %v950, %v1003
        %v1008 = vsub.f32 %v949, %v1006
        %v1009 = vsub.f32 %v950, %v1007
        %v1010 = vmul.f32 %v1008, 1.442695
        %v1011 = vpow.pop %v1010
        %v1012 = vmul.f32 %v1009, 1.442695
        %v1013 = vpow.pop %v1012
        %1014 = vxpose.xlu0.b32.start [1/16] %v733, 128
        %1015 = vxpose.xlu0.b32.cont [2/16] %v734, 128
        %1016 = vxpose.xlu0.b32.cont [3/16] 0.0, 128
        %1017 = vxpose.xlu0.b32.cont [4/16] 0.0, 128
        %1018 = vxpose.xlu0.b32.cont [5/16] 0.0, 128
        %1019 = vxpose.xlu0.b32.cont [6/16] 0.0, 128
        %1020 = vxpose.xlu0.b32.cont [7/16] 0.0, 128
        %1021 = vxpose.xlu0.b32.cont [8/16] 0.0, 128
        %1022 = vxpose.xlu0.b32.cont [9/16] 0.0, 128
        %1023 = vxpose.xlu0.b32.cont [10/16] 0.0, 128
        %1024 = vxpose.xlu0.b32.cont [11/16] 0.0, 128
        %1025 = vxpose.xlu0.b32.cont [12/16] 0.0, 128
        %1026 = vxpose.xlu0.b32.cont [13/16] 0.0, 128
        %1027 = vxpose.xlu0.b32.cont [14/16] 0.0, 128
        %1028 = vxpose.xlu0.b32.cont [15/16] 0.0, 128
        %1029 = vxpose.xlu0.b32.end [16/16] 0.0, 128
        %v1030 = vpop.trf.xlu0
        %v1031 = vpop.trf.xlu0
        %v1032 = vpop.trf.xlu0
        %v1033 = vpop.trf.xlu0
        %v1034 = vpop.trf.xlu0
        %v1035 = vpop.trf.xlu0
        %v1036 = vpop.trf.xlu0
        %v1037 = vpop.trf.xlu0
        %v1038 = vpop.trf.xlu0
        %v1039 = vpop.trf.xlu0
        %v1040 = vpop.trf.xlu0
        %v1041 = vpop.trf.xlu0
        %v1042 = vpop.trf.xlu0
        %v1043 = vpop.trf.xlu0
        %v1044 = vpop.trf.xlu0
        %v1045 = vpop.trf.xlu0
        %vm1046 = vcmask 130048
        %v1048 = vsel %vm1046, %v1030, 0
        %v1051 = vsel %vm1046, %v1031, 0
        %v1054 = vsel %vm1046, %v1032, 0
        %v1057 = vsel %vm1046, %v1033, 0
        %v1060 = vsel %vm1046, %v1034, 0
        %v1063 = vsel %vm1046, %v1035, 0
        %v1066 = vsel %vm1046, %v1036, 0
        %v1069 = vsel %vm1046, %v1037, 0
        %v1072 = vsel %vm1046, %v1038, 0
        %v1075 = vsel %vm1046, %v1039, 0
        %v1078 = vsel %vm1046, %v1040, 0
        %v1081 = vsel %vm1046, %v1041, 0
        %v1084 = vsel %vm1046, %v1042, 0
        %v1087 = vsel %vm1046, %v1043, 0
        %v1090 = vsel %vm1046, %v1044, 0
        %v1093 = vsel %vm1046, %v1045, 0
        %1095 = vmatpush.msra.mxu0 0.0
        %1096 = vmatpush.msra.mxu0 0.0
        %1097 = vmatpush.msra.mxu0 0.0
        %1098 = vmatpush.msra.mxu0 0.0
        %1099 = vmatpush.msra.mxu0 0.0
        %1100 = vmatpush.msra.mxu0 0.0
        %1101 = vmatpush.msra.mxu0 0.0
        %1102 = vmatpush.msra.mxu0 0.0
        %1103 = vmatpush.msra.mxu0 0.0
        %1104 = vmatpush.msra.mxu0 0.0
        %1105 = vmatpush.msra.mxu0 0.0
        %1106 = vmatpush.msra.mxu0 0.0
        %1107 = vmatpush.msra.mxu0 0.0
        %1108 = vmatpush.msra.mxu0 0.0
        %1109 = vmatpush.msra.mxu0 %v1007
        %1110 = vmatpush.msra.mxu0 %v1006
        %1111 = vmatmul.f32.gmra.mxu0 %v1048
        %v1112 = vpop.f32.mrf.mxu0
        %v1113 = vadd.f32 0.0, %v1112
        %1114 = vmatmul.f32.gmra.mxu0 %v1051
        %v1115 = vpop.f32.mrf.mxu0
        %v1116 = vadd.f32 0.0, %v1115
        %1117 = vmatmul.f32.gmra.mxu0 %v1054
        %v1118 = vpop.f32.mrf.mxu0
        %v1119 = vadd.f32 0.0, %v1118
        %1120 = vmatmul.f32.gmra.mxu0 %v1057
        %v1121 = vpop.f32.mrf.mxu0
        %v1122 = vadd.f32 0.0, %v1121
        %1123 = vmatmul.f32.gmra.mxu0 %v1060
        %v1124 = vpop.f32.mrf.mxu0
        %v1125 = vadd.f32 0.0, %v1124
        %1126 = vmatmul.f32.gmra.mxu0 %v1063
        %v1127 = vpop.f32.mrf.mxu0
        %v1128 = vadd.f32 0.0, %v1127
        %1129 = vmatmul.f32.gmra.mxu0 %v1066
        %v1130 = vpop.f32.mrf.mxu0
        %v1131 = vadd.f32 0.0, %v1130
        %1132 = vmatmul.f32.gmra.mxu0 %v1069
        %v1133 = vpop.f32.mrf.mxu0
        %v1134 = vadd.f32 0.0, %v1133
        %1135 = vmatmul.f32.gmra.mxu0 %v1072
        %v1136 = vpop.f32.mrf.mxu0
        %v1137 = vadd.f32 0.0, %v1136
        %1138 = vmatmul.f32.gmra.mxu0 %v1075
        %v1139 = vpop.f32.mrf.mxu0
        %v1140 = vadd.f32 0.0, %v1139
        %1141 = vmatmul.f32.gmra.mxu0 %v1078
        %v1142 = vpop.f32.mrf.mxu0
        %v1143 = vadd.f32 0.0, %v1142
        %1144 = vmatmul.f32.gmra.mxu0 %v1081
        %v1145 = vpop.f32.mrf.mxu0
        %v1146 = vadd.f32 0.0, %v1145
        %1147 = vmatmul.f32.gmra.mxu0 %v1084
        %v1148 = vpop.f32.mrf.mxu0
        %v1149 = vadd.f32 0.0, %v1148
        %1150 = vmatmul.f32.gmra.mxu0 %v1087
        %v1151 = vpop.f32.mrf.mxu0
        %v1152 = vadd.f32 0.0, %v1151
        %1153 = vmatmul.f32.gmra.mxu0 %v1090
        %v1154 = vpop.f32.mrf.mxu0
        %v1155 = vadd.f32 0.0, %v1154
        %1156 = vmatmul.f32.gmra.mxu0 %v1093
        %v1157 = vpop.f32.mrf.mxu0
        %v1158 = vadd.f32 0.0, %v1157
        %1159 = vdwg.mxu0
        %v1160 = vsub.f32 %v704, %v1113
        %v1161 = vsub.f32 %v705, %v1116
        %v1162 = vsub.f32 %v706, %v1119
        %v1163 = vsub.f32 %v707, %v1122
        %v1164 = vsub.f32 %v708, %v1125
        %v1165 = vsub.f32 %v709, %v1128
        %v1166 = vsub.f32 %v710, %v1131
        %v1167 = vsub.f32 %v711, %v1134
        %v1168 = vsub.f32 %v712, %v1137
        %v1169 = vsub.f32 %v713, %v1140
        %v1170 = vsub.f32 %v714, %v1143
        %v1171 = vsub.f32 %v715, %v1146
        %v1172 = vsub.f32 %v716, %v1149
        %v1173 = vsub.f32 %v717, %v1152
        %v1174 = vsub.f32 %v718, %v1155
        %v1175 = vsub.f32 %v719, %v1158
        %v1176 = vmin.f32 %v1160, 0.0
        %v1177 = vmin.f32 %v1161, 0.0
        %v1178 = vmin.f32 %v1162, 0.0
        %v1179 = vmin.f32 %v1163, 0.0
        %v1180 = vmin.f32 %v1164, 0.0
        %v1181 = vmin.f32 %v1165, 0.0
        %v1182 = vmin.f32 %v1166, 0.0
        %v1183 = vmin.f32 %v1167, 0.0
        %v1184 = vmin.f32 %v1168, 0.0
        %v1185 = vmin.f32 %v1169, 0.0
        %v1186 = vmin.f32 %v1170, 0.0
        %v1187 = vmin.f32 %v1171, 0.0
        %v1188 = vmin.f32 %v1172, 0.0
        %v1189 = vmin.f32 %v1173, 0.0
        %v1190 = vmin.f32 %v1174, 0.0
        %v1191 = vmin.f32 %v1175, 0.0
        %v1192 = vmul.f32 %v1176, 1.442695
        %v1193 = vpow.pop %v1192
        %v1194 = vmul.f32 %v1177, 1.442695
        %v1195 = vpow.pop %v1194
        %v1196 = vmul.f32 %v1178, 1.442695
        %v1197 = vpow.pop %v1196
        %v1198 = vmul.f32 %v1179, 1.442695
        %v1199 = vpow.pop %v1198
        %v1200 = vmul.f32 %v1180, 1.442695
        %v1201 = vpow.pop %v1200
        %v1202 = vmul.f32 %v1181, 1.442695
        %v1203 = vpow.pop %v1202
        %v1204 = vmul.f32 %v1182, 1.442695
        %v1205 = vpow.pop %v1204
        %v1206 = vmul.f32 %v1183, 1.442695
        %v1207 = vpow.pop %v1206
        %v1208 = vmul.f32 %v1184, 1.442695
        %v1209 = vpow.pop %v1208
        %v1210 = vmul.f32 %v1185, 1.442695
        %v1211 = vpow.pop %v1210
        %v1212 = vmul.f32 %v1186, 1.442695
        %v1213 = vpow.pop %v1212
        %v1214 = vmul.f32 %v1187, 1.442695
        %v1215 = vpow.pop %v1214
        %v1216 = vmul.f32 %v1188, 1.442695
        %v1217 = vpow.pop %v1216
        %v1218 = vmul.f32 %v1189, 1.442695
        %v1219 = vpow.pop %v1218
        %v1220 = vmul.f32 %v1190, 1.442695
        %v1221 = vpow.pop %v1220
        %v1222 = vmul.f32 %v1191, 1.442695
        %v1223 = vpow.pop %v1222
        %v1224 = vld [vmem:[%s5] sm:$0xf]
        %v1226 = vsel %vm738, %v1193, 0
        %v1229 = vsel %vm738, %v1195, 0
        %v1232 = vsel %vm738, %v1197, 0
        %v1235 = vsel %vm738, %v1199, 0
        %v1238 = vsel %vm738, %v1201, 0
        %v1241 = vsel %vm738, %v1203, 0
        %v1244 = vsel %vm738, %v1205, 0
        %v1247 = vsel %vm738, %v1207, 0
        %v1250 = vsel %vm738, %v1209, 0
        %v1253 = vsel %vm738, %v1211, 0
        %v1256 = vsel %vm738, %v1213, 0
        %v1259 = vsel %vm738, %v1215, 0
        %v1262 = vsel %vm738, %v1217, 0
        %v1265 = vsel %vm738, %v1219, 0
        %v1268 = vsel %vm738, %v1221, 0
        %v1271 = vsel %vm738, %v1223, 0
        %v1274 = vsel %vm900, %v1224, 0
        %1276 = vmatpush.msra.mxu0 0.0
        %1277 = vmatpush.msra.mxu0 0.0
        %1278 = vmatpush.msra.mxu0 0.0
        %1279 = vmatpush.msra.mxu0 0.0
        %1280 = vmatpush.msra.mxu0 0.0
        %1281 = vmatpush.msra.mxu0 0.0
        %1282 = vmatpush.msra.mxu0 0.0
        %1283 = vmatpush.msra.mxu0 0.0
        %1284 = vmatpush.msra.mxu0 0.0
        %1285 = vmatpush.msra.mxu0 0.0
        %1286 = vmatpush.msra.mxu0 0.0
        %1287 = vmatpush.msra.mxu0 0.0
        %1288 = vmatpush.msra.mxu0 0.0
        %1289 = vmatpush.msra.mxu0 0.0
        %1290 = vmatpush.msra.mxu0 0.0
        %1291 = vmatpush.msra.mxu0 %v1274
        %1292 = vmatmul.f32.gmra.mxu0 %v1226
        %v1293 = vpop.f32.mrf.mxu0
        %v1294 = vadd.f32 0.0, %v1293
        %1295 = vmatmul.f32.gmra.mxu0 %v1229
        %v1296 = vpop.f32.mrf.mxu0
        %v1297 = vadd.f32 0.0, %v1296
        %1298 = vmatmul.f32.gmra.mxu0 %v1232
        %v1299 = vpop.f32.mrf.mxu0
        %v1300 = vadd.f32 0.0, %v1299
        %1301 = vmatmul.f32.gmra.mxu0 %v1235
        %v1302 = vpop.f32.mrf.mxu0
        %v1303 = vadd.f32 0.0, %v1302
        %1304 = vmatmul.f32.gmra.mxu0 %v1238
        %v1305 = vpop.f32.mrf.mxu0
        %v1306 = vadd.f32 0.0, %v1305
        %1307 = vmatmul.f32.gmra.mxu0 %v1241
        %v1308 = vpop.f32.mrf.mxu0
        %v1309 = vadd.f32 0.0, %v1308
        %1310 = vmatmul.f32.gmra.mxu0 %v1244
        %v1311 = vpop.f32.mrf.mxu0
        %v1312 = vadd.f32 0.0, %v1311
        %1313 = vmatmul.f32.gmra.mxu0 %v1247
        %v1314 = vpop.f32.mrf.mxu0
        %v1315 = vadd.f32 0.0, %v1314
        %1316 = vmatmul.f32.gmra.mxu0 %v1250
        %v1317 = vpop.f32.mrf.mxu0
        %v1318 = vadd.f32 0.0, %v1317
        %1319 = vmatmul.f32.gmra.mxu0 %v1253
        %v1320 = vpop.f32.mrf.mxu0
        %v1321 = vadd.f32 0.0, %v1320
        %1322 = vmatmul.f32.gmra.mxu0 %v1256
        %v1323 = vpop.f32.mrf.mxu0
        %v1324 = vadd.f32 0.0, %v1323
        %1325 = vmatmul.f32.gmra.mxu0 %v1259
        %v1326 = vpop.f32.mrf.mxu0
        %v1327 = vadd.f32 0.0, %v1326
        %1328 = vmatmul.f32.gmra.mxu0 %v1262
        %v1329 = vpop.f32.mrf.mxu0
        %v1330 = vadd.f32 0.0, %v1329
        %1331 = vmatmul.f32.gmra.mxu0 %v1265
        %v1332 = vpop.f32.mrf.mxu0
        %v1333 = vadd.f32 0.0, %v1332
        %1334 = vmatmul.f32.gmra.mxu0 %v1268
        %v1335 = vpop.f32.mrf.mxu0
        %v1336 = vadd.f32 0.0, %v1335
        %1337 = vmatmul.f32.gmra.mxu0 %v1271
        %v1338 = vpop.f32.mrf.mxu0
        %v1339 = vadd.f32 0.0, %v1338
        %1340 = vdwg.mxu0
        %1357 = vrot.lane.b32.xlu0 %v459, 96
        %v1358 = vpop.permute.xlu0 %1357
        %1359 = vrot.lane.b32.xlu0 %v462, 96
        %v1360 = vpop.permute.xlu0 %1359
        %1361 = vrot.lane.b32.xlu0 %v465, 96
        %v1362 = vpop.permute.xlu0 %1361
        %1363 = vrot.lane.b32.xlu0 %v468, 96
        %v1364 = vpop.permute.xlu0 %1363
        %1365 = vrot.lane.b32.xlu0 %v471, 96
        %v1366 = vpop.permute.xlu0 %1365
        %1367 = vrot.lane.b32.xlu0 %v474, 96
        %v1368 = vpop.permute.xlu0 %1367
        %1369 = vrot.lane.b32.xlu0 %v477, 96
        %v1370 = vpop.permute.xlu0 %1369
        %1371 = vrot.lane.b32.xlu0 %v480, 96
        %v1372 = vpop.permute.xlu0 %1371
        %1373 = vrot.lane.b32.xlu0 %v483, 96
        %v1374 = vpop.permute.xlu0 %1373
        %1375 = vrot.lane.b32.xlu0 %v486, 96
        %v1376 = vpop.permute.xlu0 %1375
        %1377 = vrot.lane.b32.xlu0 %v489, 96
        %v1378 = vpop.permute.xlu0 %1377
        %1379 = vrot.lane.b32.xlu0 %v492, 96
        %v1380 = vpop.permute.xlu0 %1379
        %1381 = vrot.lane.b32.xlu0 %v495, 96
        %v1382 = vpop.permute.xlu0 %1381
        %1383 = vrot.lane.b32.xlu0 %v498, 96
        %v1384 = vpop.permute.xlu0 %1383
        %1385 = vrot.lane.b32.xlu0 %v501, 96
        %v1386 = vpop.permute.xlu0 %1385
        %1387 = vrot.lane.b32.xlu0 %v504, 96
        %v1388 = vpop.permute.xlu0 %1387
        %v1405 = vmul.f32 %v1294, %v1358
        %v1406 = vmul.f32 %v1297, %v1360
        %v1407 = vmul.f32 %v1300, %v1362
        %v1408 = vmul.f32 %v1303, %v1364
        %v1409 = vmul.f32 %v1306, %v1366
        %v1410 = vmul.f32 %v1309, %v1368
        %v1411 = vmul.f32 %v1312, %v1370
        %v1412 = vmul.f32 %v1315, %v1372
        %v1413 = vmul.f32 %v1318, %v1374
        %v1414 = vmul.f32 %v1321, %v1376
        %v1415 = vmul.f32 %v1324, %v1378
        %v1416 = vmul.f32 %v1327, %v1380
        %v1417 = vmul.f32 %v1330, %v1382
        %v1418 = vmul.f32 %v1333, %v1384
        %v1419 = vmul.f32 %v1336, %v1386
        %v1420 = vmul.f32 %v1339, %v1388
        %1437 = vrot.lane.b32.xlu0 %v1405, 4
        %v1438 = vpop.permute.xlu0 %1437
        %1439 = vrot.lane.b32.xlu0 %v1406, 4
        %v1440 = vpop.permute.xlu0 %1439
        %1441 = vrot.lane.b32.xlu0 %v1407, 4
        %v1442 = vpop.permute.xlu0 %1441
        %1443 = vrot.lane.b32.xlu0 %v1408, 4
        %v1444 = vpop.permute.xlu0 %1443
        %1445 = vrot.lane.b32.xlu0 %v1409, 4
        %v1446 = vpop.permute.xlu0 %1445
        %1447 = vrot.lane.b32.xlu0 %v1410, 4
        %v1448 = vpop.permute.xlu0 %1447
        %1449 = vrot.lane.b32.xlu0 %v1411, 4
        %v1450 = vpop.permute.xlu0 %1449
        %1451 = vrot.lane.b32.xlu0 %v1412, 4
        %v1452 = vpop.permute.xlu0 %1451
        %1453 = vrot.lane.b32.xlu0 %v1413, 4
        %v1454 = vpop.permute.xlu0 %1453
        %1455 = vrot.lane.b32.xlu0 %v1414, 4
        %v1456 = vpop.permute.xlu0 %1455
        %1457 = vrot.lane.b32.xlu0 %v1415, 4
        %v1458 = vpop.permute.xlu0 %1457
        %1459 = vrot.lane.b32.xlu0 %v1416, 4
        %v1460 = vpop.permute.xlu0 %1459
        %1461 = vrot.lane.b32.xlu0 %v1417, 4
        %v1462 = vpop.permute.xlu0 %1461
        %1463 = vrot.lane.b32.xlu0 %v1418, 4
        %v1464 = vpop.permute.xlu0 %1463
        %1465 = vrot.lane.b32.xlu0 %v1419, 4
        %v1466 = vpop.permute.xlu0 %1465
        %1467 = vrot.lane.b32.xlu0 %v1420, 4
        %v1468 = vpop.permute.xlu0 %1467
        %v1485 = vsel %vm738, %v1193, %v1438
        %v1486 = vsel %vm738, %v1195, %v1440
        %v1487 = vsel %vm738, %v1197, %v1442
        %v1488 = vsel %vm738, %v1199, %v1444
        %v1489 = vsel %vm738, %v1201, %v1446
        %v1490 = vsel %vm738, %v1203, %v1448
        %v1491 = vsel %vm738, %v1205, %v1450
        %v1492 = vsel %vm738, %v1207, %v1452
        %v1493 = vsel %vm738, %v1209, %v1454
        %v1494 = vsel %vm738, %v1211, %v1456
        %v1495 = vsel %vm738, %v1213, %v1458
        %v1496 = vsel %vm738, %v1215, %v1460
        %v1497 = vsel %vm738, %v1217, %v1462
        %v1498 = vsel %vm738, %v1219, %v1464
        %v1499 = vsel %vm738, %v1221, %v1466
        %v1500 = vsel %vm738, %v1223, %v1468
        %v1501 = vsel %vm688, %v1485, 0.0
        %v1502 = vsel %vm689, %v1486, 0.0
        %v1503 = vsel %vm690, %v1487, 0.0
        %v1504 = vsel %vm691, %v1488, 0.0
        %v1505 = vsel %vm692, %v1489, 0.0
        %v1506 = vsel %vm693, %v1490, 0.0
        %v1507 = vsel %vm694, %v1491, 0.0
        %v1508 = vsel %vm695, %v1492, 0.0
        %v1509 = vsel %vm696, %v1493, 0.0
        %v1510 = vsel %vm697, %v1494, 0.0
        %v1511 = vsel %vm698, %v1495, 0.0
        %v1512 = vsel %vm699, %v1496, 0.0
        %v1513 = vsel %vm700, %v1497, 0.0
        %v1514 = vsel %vm701, %v1498, 0.0
        %v1515 = vsel %vm702, %v1499, 0.0
        %v1516 = vsel %vm703, %v1500, 0.0
        %1517 = vmatpush.msra.mxu0 %v1516
        %1518 = vmatpush.msra.mxu0 %v1515
        %1519 = vmatpush.msra.mxu0 %v1514
        %1520 = vmatpush.msra.mxu0 %v1513
        %1521 = vmatpush.msra.mxu0 %v1512
        %1522 = vmatpush.msra.mxu0 %v1511
        %1523 = vmatpush.msra.mxu0 %v1510
        %1524 = vmatpush.msra.mxu0 %v1509
        %1525 = vmatpush.msra.mxu0 %v1508
        %1526 = vmatpush.msra.mxu0 %v1507
        %1527 = vmatpush.msra.mxu0 %v1506
        %1528 = vmatpush.msra.mxu0 %v1505
        %1529 = vmatpush.msra.mxu0 %v1504
        %1530 = vmatpush.msra.mxu0 %v1503
        %1531 = vmatpush.msra.mxu0 %v1502
        %1532 = vmatpush.msra.mxu0 %v1501
        %1533 = vmatmul.f32.gmra.mxu0 %v733
        %v1534 = vpop.f32.mrf.mxu0
        %v1535 = vadd.f32 0.0, %v1534
        %1536 = vmatmul.f32.gmra.mxu0 %v734
        %v1537 = vpop.f32.mrf.mxu0
        %v1538 = vadd.f32 0.0, %v1537
        %1539 = vdwg.mxu0
        %v1541 = vsel %vm738, %v1011, 0
        %v1544 = vsel %vm738, %v1013, 0
        %1546 = vmatpush.msra.mxu0 0.0
        %1547 = vmatpush.msra.mxu0 0.0
        %1548 = vmatpush.msra.mxu0 0.0
        %1549 = vmatpush.msra.mxu0 0.0
        %1550 = vmatpush.msra.mxu0 0.0
        %1551 = vmatpush.msra.mxu0 0.0
        %1552 = vmatpush.msra.mxu0 0.0
        %1553 = vmatpush.msra.mxu0 0.0
        %1554 = vmatpush.msra.mxu0 0.0
        %1555 = vmatpush.msra.mxu0 0.0
        %1556 = vmatpush.msra.mxu0 0.0
        %1557 = vmatpush.msra.mxu0 0.0
        %1558 = vmatpush.msra.mxu0 0.0
        %1559 = vmatpush.msra.mxu0 0.0
        %1560 = vmatpush.msra.mxu0 0.0
        %1561 = vmatpush.msra.mxu0 %v1274
        %1562 = vmatmul.f32.gmra.mxu0 %v1541
        %v1563 = vpop.f32.mrf.mxu0
        %v1564 = vadd.f32 0.0, %v1563
        %1565 = vmatmul.f32.gmra.mxu0 %v1544
        %v1566 = vpop.f32.mrf.mxu0
        %v1567 = vadd.f32 0.0, %v1566
        %1568 = vdwg.mxu0
        %1569 = vst.msk [vmem:[#allocation2] sm:$0xff] %vm738, %v1006
        %1570 = vst.msk [vmem:[#allocation2 + $0x8] sm:$0xff] %vm738, %v1007
        %v1571 = vld [vmem:[#allocation3] sm:$0xff]
        %v1572 = vld [vmem:[#allocation3 + $0x8] sm:$0xff]
        %v1573 = vmul.f32 %v1011, %v1571
        %v1574 = vmul.f32 %v1013, %v1572
        %v1575 = vadd.f32 %v1573, %v1535
        %v1576 = vadd.f32 %v1574, %v1538
        %1577 = vst.msk [vmem:[#allocation3] sm:$0xff] %vm738, %v1575
        %1578 = vst.msk [vmem:[#allocation3 + $0x8] sm:$0xff] %vm738, %v1576
        %v1579 = vld [vmem:[#allocation4] sm:$0xff]
        %v1580 = vld [vmem:[#allocation4 + $0x8] sm:$0xff]
        %v1581 = vmul.f32 %v1564, %v1579
        %v1582 = vmul.f32 %v1567, %v1580
        %1585 = vrot.lane.b32.xlu0 %v1535, 124
        %v1586 = vpop.permute.xlu0 %1585
        %1587 = vrot.lane.b32.xlu0 %v1538, 124
        %v1588 = vpop.permute.xlu0 %1587
        %v1591 = vadd.f32 %v1581, %v1586
        %v1592 = vadd.f32 %v1582, %v1588
        %1593 = vst.msk [vmem:[#allocation4] sm:$0xff] %vm558, %v1591
        %1594 = vst.msk [vmem:[#allocation4 + $0x8] sm:$0xff] %vm558, %v1592
        %p1595 = scmp.eq.s32.totalorder %s23, 1
        // Predicated region
        $region49: #{tpu_custom_call.1} parent=43 // pred_check
          %p1596 = pneg %p1595
        $region50: #{tpu_custom_call.1} parent=43 // pred_check_branch
          %1598 = sbr.rel (%p1596) target = $region52
        $region51: #{tpu_custom_call.1} parent=43 // pred_region
          %v1599 = vld [vmem:[#allocation3] sm:$0xff]
          %v1600 = vld [vmem:[#allocation3 + $0x8] sm:$0xff]
          %v1601 = vld [vmem:[%s5] sm:$0xf]
          %v1602 = vld [vmem:[#allocation4] sm:$0xff]
          %v1603 = vld [vmem:[#allocation4 + $0x8] sm:$0xff]
          %v1605 = vsel %vm738, %v1599, 0
          %v1608 = vsel %vm738, %v1600, 0
          %v1611 = vsel %vm900, %v1601, 0
          %1613 = vmatpush.msra.mxu0 0.0
          %1614 = vmatpush.msra.mxu0 0.0
          %1615 = vmatpush.msra.mxu0 0.0
          %1616 = vmatpush.msra.mxu0 0.0
          %1617 = vmatpush.msra.mxu0 0.0
          %1618 = vmatpush.msra.mxu0 0.0
          %1619 = vmatpush.msra.mxu0 0.0
          %1620 = vmatpush.msra.mxu0 0.0
          %1621 = vmatpush.msra.mxu0 0.0
          %1622 = vmatpush.msra.mxu0 0.0
          %1623 = vmatpush.msra.mxu0 0.0
          %1624 = vmatpush.msra.mxu0 0.0
          %1625 = vmatpush.msra.mxu0 0.0
          %1626 = vmatpush.msra.mxu0 0.0
          %1627 = vmatpush.msra.mxu0 0.0
          %1628 = vmatpush.msra.mxu0 %v1611
          %1629 = vmatmul.f32.gmra.mxu0 %v1605
          %v1630 = vpop.f32.mrf.mxu0
          %v1631 = vadd.f32 1e-16, %v1630
          %1632 = vmatmul.f32.gmra.mxu0 %v1608
          %v1633 = vpop.f32.mrf.mxu0
          %v1634 = vadd.f32 1e-16, %v1633
          %1635 = vdwg.mxu0
          %v1636 = vrcp.pop %v1631
          %v1637 = vmul.f32 %v1631, %v1636
          %v1638 = vsub.f32 1.0, %v1637
          %v1639 = vmul.f32 %v1636, %v1638
          %v1640 = vadd.f32 %v1636, %v1639
          %vm1641 = vweird.f32 %v1631
          %vm1642 = vweird.f32 %v1636
          %vm1643 = vmor %vm1641, %vm1642
          %v1644 = vsel %vm1643, %v1636, %v1640
          %v1645 = vand.u32 2147483647, %v1631
          %vm1646 = vcmp.eq.f32.partialorder %v1645, 8.507059e+37
          %v1647 = vand.u32 %v1631, 2147483648
          %v1648 = vor.u32 1.1754944e-38, %v1647
          %v1649 = vsel %vm1646, %v1648, %v1644
          %v1650 = vmul.f32 %v1602, %v1649
          %v1651 = vrcp.pop %v1634
          %v1652 = vmul.f32 %v1634, %v1651
          %v1653 = vsub.f32 1.0, %v1652
          %v1654 = vmul.f32 %v1651, %v1653
          %v1655 = vadd.f32 %v1651, %v1654
          %vm1656 = vweird.f32 %v1634
          %vm1657 = vweird.f32 %v1651
          %vm1658 = vmor %vm1656, %vm1657
          %v1659 = vsel %vm1658, %v1651, %v1655
          %v1660 = vand.u32 2147483647, %v1634
          %vm1661 = vcmp.eq.f32.partialorder %v1660, 8.507059e+37
          %v1662 = vand.u32 %v1634, 2147483648
          %v1663 = vor.u32 1.1754944e-38, %v1662
          %v1664 = vsel %vm1661, %v1663, %v1659
          %v1665 = vmul.f32 %v1603, %v1664
          %1666 = vst.msk [vmem:[#allocation5] sm:$0xff] %vm558, %v1650
          %1667 = vst.msk [vmem:[#allocation5 + $0x8] sm:$0xff] %vm558, %v1665
        $region52: #{tpu_custom_call.1} parent=43 // pred_fallthru
          _
        // Predicated region
        $region53: #{tpu_custom_call.1} parent=43 // pred_check
          %p1668 = pneg %p184
        $region54: #{tpu_custom_call.1} parent=43 // pred_check_branch
          %1670 = sbr.rel (%p1668) target = $region56
        $region55: #{tpu_custom_call.1} parent=43 // pred_region
          %s1671 = smul.u32 2, %s22
          %1673 = vsyncadd [#allocation6], 0
          %s1674 = smul.addr %s1671, 8
          %s1675 = scalar_lea.hbm %s6, %s1674
          %s1676 = sshll.u32 [#allocation5], 4
          %s1677 = int_to_ptr.vmem [resolvable:$true] %s1676
          %s1678 = sshll.u32 %s1675, 4
          %s1679 = int_to_ptr.hbm [resolvable:$true] %s1678
          %1684 = dma.vmem_to_hbm [thread:$0]  %s1677, 256, %s1679, [#allocation6], 128, 128, 8
        $region56: #{tpu_custom_call.1} parent=43 // pred_fallthru
          _
        // Predicated region
        $region57: #{tpu_custom_call.1} parent=43 // pred_check
          %p1685 = pneg %p184
        $region58: #{tpu_custom_call.1} parent=43 // pred_check_branch
          %1687 = sbr.rel (%p1685) target = $region60
        $region59: #{tpu_custom_call.1} parent=43 // pred_region
          %1689 = dma.done [#allocation6], 256
        $region60: #{tpu_custom_call.1} parent=43 // pred_fallthru
          _
      $region44: #{tpu_custom_call.1} parent=5 // pred_fallthru
        _
      %p1690 = scmp.le.s32.totalorder 2, %s13
      // Predicated region
      $region61: #{tpu_custom_call.1} parent=5 // pred_check
        %p1691 = pneg %p1690
      $region62: #{tpu_custom_call.1} parent=5 // pred_check_branch
        %1693 = sbr.rel (%p1691) target = $region64
      $region63: #{tpu_custom_call.1} parent=5 // pred_region
        %s1694 = ssub.s32 %s13, 2
      $region64: #{tpu_custom_call.1} parent=5 // pred_fallthru
        _
    $region6: #{tpu_custom_call.1} parent=1 // loop_footer
      %s17 = sadd.s32 1, %s13
    $region7: #{tpu_custom_call.1} parent=1 // loop_footer_branch
      %12 = sbr.rel target = $region3
    $region8: #{tpu_custom_call.1} parent=1 // loop_exit
      _
    %1695 = vsyncpa [#allocation6], 1
    %s1696 = scalar_lea.sflag [#allocation6], 1
    %1697 = vsyncpa %s1696, 1

</llo_original>
